<compile_context>
chip_gen: v7x
topology: tpu7x:2x2x1
jax: 0.10.0
libtpu: 0.0.40
codegen_flags: <defaults>
</compile_context>

<pallas_src>
import functools

import jax
import jax.numpy as jnp
from jax.experimental import pallas as pl
from jax.experimental.pallas import tpu as pltpu


def _bert_embedding_kernel(*refs, n_seg, dropout_p, training):
    use_dropout = training and dropout_p > 0.0
    if use_dropout:
        idlab_ref, pe_ref, tok_ref, seg_ref, rand_ref, out_ref = refs
    else:
        idlab_ref, pe_ref, tok_ref, seg_ref, out_ref = refs

    tile, emb_dim = out_ref.shape
    v_pad = tok_ref.shape[0]

    ids = idlab_ref[:, 0:1]     # (tile, 1) token ids
    segs = idlab_ref[:, 1:2]    # (tile, 1) segment labels

    # Token lookup as a one-hot matmul on the MXU.  K = padded vocab (multiple of 128),
    # f32 accumulation, so selected rows are exact.
    col = jax.lax.broadcasted_iota(jnp.int32, (tile, v_pad), 1)
    onehot = (col == ids).astype(tok_ref.dtype)
    tok_emb = jnp.dot(onehot, tok_ref[...], preferred_element_type=jnp.float32)

    # Segment lookup: tiny table (n_seg real rows) -> f32 select/sum on the VPU,
    # keeping the MXU K dimension clean (no segment rows in the matmul).
    seg_emb = jnp.zeros((tile, emb_dim), jnp.float32)
    for s in range(n_seg):
        row = seg_ref[s:s + 1, :]                                   # (1, E) f32
        seg_emb = seg_emb + (segs == s).astype(jnp.float32) * row   # (tile, E)

    # x = token(sequence) + position(x) + segment(label)   (f32 add path)
    x = tok_emb + pe_ref[...] + seg_emb

    # nn.Dropout(p): identity in eval mode; inverted dropout in training mode.
    if use_dropout:
        scale = 1.0 / (1.0 - dropout_p) if dropout_p < 1.0 else 0.0
        keep = rand_ref[...] >= jnp.float32(dropout_p)   # keep prob = 1 - p
        x = jnp.where(keep, x * jnp.float32(scale), 0.0)

    out_ref[...] = x.astype(out_ref.dtype)


def _pick_tile(seq_len):
    # Biggest row tile that divides S (up to the full 512-token BERT max length).
    for t in (512, 256, 128, 64, 32, 16, 8):
        if seq_len % t == 0:
            return t
    return seq_len


def _pad_rows(x, mult):
    rows = x.shape[0]
    padded = -(-rows // mult) * mult
    if padded == rows:
        return x
    return jnp.zeros((padded,) + x.shape[1:], x.dtype).at[:rows].set(x)


def bert_embedding(sequence, label, tok_table, seg_table, pe,
                   *, dropout_p=0.1, training=False, seed=0):
    """sequence, label: (B, S) int32.  Returns (B, S, E) float32."""
    B, S = sequence.shape
    assert S <= 512, "Sequence too long"
    assert S % 8 == 0, "pad the sequence length to a multiple of 8"
    V, E = tok_table.shape
    n_seg = seg_table.shape[0]
    N = B * S

    # Token table padded to a multiple of 128 rows (clean MXU K passes); padded rows are
    # never selected by the one-hot, so they contribute zero.
    tok_p = _pad_rows(tok_table, 128)
    v_pad = tok_p.shape[0]

    # Segment table: f32, padded to a sublane multiple.
    seg_p = _pad_rows(seg_table.astype(jnp.float32), 8)
    n_seg_pad = seg_p.shape[0]

    # Pack (token id, segment id) per flattened row into one compact int32 operand.
    idlab = jnp.stack(
        [sequence.reshape(N), label.reshape(N)], axis=-1).astype(jnp.int32)   # (N, 2)

    pe_s = pe[:S].astype(jnp.float32)                                          # (S, E), passed once

    tile_s = _pick_tile(S)
    s_tiles = S // tile_s
    grid = (s_tiles, B)   # seq-tiles OUTER so the PE tile is reused across the batch loop

    in_specs = [
        # packed ids/labels: rows [b*S + s*tile_s, ... + tile_s)
        pl.BlockSpec((tile_s, 2), lambda s, b: (b * s_tiles + s, 0)),
        # position encoding: depends only on the seq-tile index
        pl.BlockSpec((tile_s, E), lambda s, b: (s, 0)),
        # token table: constant index -> DMA'd once, stays VMEM resident
        pl.BlockSpec((v_pad, E), lambda s, b: (0, 0)),
        # segment table: constant index
        pl.BlockSpec((n_seg_pad, E), lambda s, b: (0, 0)),
    ]
    operands = [idlab, pe_s, tok_p, seg_p]

    use_dropout = training and dropout_p > 0.0
    if use_dropout:
        # Dropout uniforms generated host-side (portable; see TODO about pltpu.prng_*).
        rand = jax.random.uniform(jax.random.PRNGKey(seed), (N, E), dtype=jnp.float32)
        in_specs.append(pl.BlockSpec((tile_s, E), lambda s, b: (b * s_tiles + s, 0)))
        operands.append(rand)

    kernel = functools.partial(_bert_embedding_kernel,
                               n_seg=n_seg, dropout_p=dropout_p, training=training)

    out = pl.pallas_call(
        kernel,
        out_shape=jax.ShapeDtypeStruct((N, E), jnp.float32),
        grid=grid,
        in_specs=in_specs,
        out_specs=pl.BlockSpec((tile_s, E), lambda s, b: (b * s_tiles + s, 0)),
        compiler_params=pltpu.CompilerParams(
            dimension_semantics=("parallel", "parallel"),
            vmem_limit_bytes=32 * 1024 * 1024,   # safe on v5e/v6e/v7x at these sizes
        ),
    )(*operands)

    return out.reshape(B, S, E)


def sinusoidal_position_encoding(max_len, d_model):
    pos = jnp.arange(max_len, dtype=jnp.float32)[:, None]
    i = jnp.arange(0, d_model, 2, dtype=jnp.float32)
    div = jnp.exp(-(jnp.log(10000.0)) * i / d_model)
    pe = jnp.zeros((max_len, d_model), jnp.float32)
    pe = pe.at[:, 0::2].set(jnp.sin(pos * div))
    pe = pe.at[:, 1::2].set(jnp.cos(pos * div))
    return pe


if __name__ == "__main__":
    B, S, E = 2, 128, 128
    VOCAB = 512
    N_SEG = 3          # SegmentEmbedding: nn.Embedding(3, E, padding_idx=0)

    key = jax.random.PRNGKey(0)
    k_tok, k_seg, k_ids, k_lbl = jax.random.split(key, 4)

    # TokenEmbedding: nn.Embedding(VOCAB, E, padding_idx=0) -> row 0 zeroed (bf16 storage).
    tok_table = (jax.random.normal(k_tok, (VOCAB, E), jnp.float32) * 0.02).astype(jnp.bfloat16)
    tok_table = tok_table.at[0].set(0)

    # SegmentEmbedding: nn.Embedding(3, E, padding_idx=0) -> row 0 zeroed.
    seg_table = (jax.random.normal(k_seg, (N_SEG, E), jnp.float32) * 0.02).astype(jnp.bfloat16)
    seg_table = seg_table.at[0].set(0)

    # PositionEmbedding: fixed sinusoidal encoding (deterministic, f32).
    pe = sinusoidal_position_encoding(512, E)

    sequence = jax.random.randint(k_ids, (B, S), 0, VOCAB, dtype=jnp.int32)
    label = jax.random.randint(k_lbl, (B, S), 0, N_SEG, dtype=jnp.int32)

    # Eval mode: dropout is identity -> deterministic, checkable against a pure-JAX reference.
    out = bert_embedding(sequence, label, tok_table, seg_table, pe,
                         dropout_p=0.1, training=False, seed=0)
    out = jax.block_until_ready(out)

    ref = (tok_table.astype(jnp.float32)[sequence]
           + seg_table.astype(jnp.float32)[label]
           + pe[None, :S, :])
    assert out.shape == (B, S, E)
    assert jnp.allclose(out, ref, atol=1e-5, rtol=1e-5), "mismatch vs reference"

    # Training mode: inverted dropout driven by host-generated uniforms.
    out_tr = bert_embedding(sequence, label, tok_table, seg_table, pe,
                            dropout_p=0.1, training=True, seed=1234)
    out_tr = jax.block_until_ready(out_tr)
    assert out_tr.shape == (B, S, E)
    assert bool(jnp.all(jnp.isfinite(out_tr)))
    zero_frac = float(jnp.mean(out_tr == 0.0))
    assert 0.02 < zero_frac < 0.30, f"unexpected dropout zero fraction {zero_frac}"
    # Every kept element must equal ref / (1 - p).
    kept_ok = jnp.all((out_tr == 0.0)
                      | jnp.isclose(out_tr, ref / 0.9, atol=1e-5, rtol=1e-4))
    assert bool(kept_ok), "kept dropout values do not match ref / (1 - p)"

    print("KERNEL_OK")
</pallas_src>

<mosaic_0001>
module attributes {stable_mosaic.version = 11 : i64} {
  func.func @_bert_embedding_kernel(%arg0: i32, %arg1: i32, %arg2: memref<128x2xi32, #tpu.memory_space<vmem>>, %arg3: memref<128x128xf32, #tpu.memory_space<vmem>>, %arg4: memref<512x128xbf16, #tpu.memory_space<vmem>>, %arg5: memref<8x128xf32, #tpu.memory_space<vmem>>, %arg6: memref<128x128xf32, #tpu.memory_space<vmem>>) attributes {dimension_semantics = [#tpu.dimension_semantics<parallel>, #tpu.dimension_semantics<parallel>], iteration_bounds = array<i64: 1, 2>, scalar_prefetch = 0 : i64, scratch_operands = 0 : i64, tpu.core_type = #tpu.core_type<tc>, window_params = [{transform_indices = @transform_0, window_bounds = array<i64: 128, 2>}, {transform_indices = @transform_1, window_bounds = array<i64: 128, 128>}, {pipeline_mode = #tpu.pipeline_mode<synchronous>, transform_indices = @transform_2, window_bounds = array<i64: 512, 128>}, {pipeline_mode = #tpu.pipeline_mode<synchronous>, transform_indices = @transform_3, window_bounds = array<i64: 8, 128>}, {transform_indices = @transform_4, window_bounds = array<i64: 128, 128>}]} {
    %c0 = arith.constant 0 : index
    %c0_0 = arith.constant 0 : index
    %0 = vector.load %arg2[%c0, %c0_0] : memref<128x2xi32, #tpu.memory_space<vmem>>, vector<128x1xi32>
    %c0_1 = arith.constant 0 : index
    %c1 = arith.constant 1 : index
    %1 = vector.load %arg2[%c0_1, %c1] : memref<128x2xi32, #tpu.memory_space<vmem>>, vector<128x1xi32>
    %2 = tpu.iota {dimensions = array<i32: 1>} : vector<128x512xi32>
    %3 = vector.broadcast %0 : vector<128x1xi32> to vector<128x512xi32>
    %4 = arith.cmpi eq, %2, %3 : vector<128x512xi32>
    %5 = arith.extui %4 : vector<128x512xi1> to vector<128x512xi32>
    %6 = arith.sitofp %5 : vector<128x512xi32> to vector<128x512xf32>
    %7 = arith.truncf %6 : vector<128x512xf32> to vector<128x512xbf16>
    %c0_2 = arith.constant 0 : index
    %c0_3 = arith.constant 0 : index
    %8 = vector.load %arg4[%c0_2, %c0_3] : memref<512x128xbf16, #tpu.memory_space<vmem>>, vector<512x128xbf16>
    %cst = arith.constant dense<0.000000e+00> : vector<128x128xf32>
    %9 = tpu.matmul %7, %8, %cst {dimension_numbers = #tpu.dot_dimension_numbers<[1], [0], [0], [1], [0, 0, 1, 1], [], []>} : vector<128x512xbf16>, vector<512x128xbf16>, vector<128x128xf32> -> vector<128x128xf32>
    %cst_4 = arith.constant 0.000000e+00 : f32
    %10 = vector.broadcast %cst_4 : f32 to vector<128x128xf32>
    %c0_5 = arith.constant 0 : index
    %c0_6 = arith.constant 0 : index
    %11 = vector.load %arg5[%c0_5, %c0_6] : memref<8x128xf32, #tpu.memory_space<vmem>>, vector<1x128xf32>
    %c0_i32 = arith.constant 0 : i32
    %12 = vector.broadcast %c0_i32 : i32 to vector<128x1xi32>
    %13 = arith.cmpi eq, %1, %12 : vector<128x1xi32>
    %14 = arith.extui %13 : vector<128x1xi1> to vector<128x1xi32>
    %15 = arith.sitofp %14 : vector<128x1xi32> to vector<128x1xf32>
    %16 = vector.broadcast %15 : vector<128x1xf32> to vector<128x128xf32>
    %17 = vector.broadcast %11 : vector<1x128xf32> to vector<128x128xf32>
    %18 = arith.mulf %16, %17 : vector<128x128xf32>
    %19 = arith.addf %10, %18 : vector<128x128xf32>
    %c1_7 = arith.constant 1 : index
    %c0_8 = arith.constant 0 : index
    %20 = vector.load %arg5[%c1_7, %c0_8] : memref<8x128xf32, #tpu.memory_space<vmem>>, vector<1x128xf32>
    %c1_i32 = arith.constant 1 : i32
    %21 = vector.broadcast %c1_i32 : i32 to vector<128x1xi32>
    %22 = arith.cmpi eq, %1, %21 : vector<128x1xi32>
    %23 = arith.extui %22 : vector<128x1xi1> to vector<128x1xi32>
    %24 = arith.sitofp %23 : vector<128x1xi32> to vector<128x1xf32>
    %25 = vector.broadcast %24 : vector<128x1xf32> to vector<128x128xf32>
    %26 = vector.broadcast %20 : vector<1x128xf32> to vector<128x128xf32>
    %27 = arith.mulf %25, %26 : vector<128x128xf32>
    %28 = arith.addf %19, %27 : vector<128x128xf32>
    %c2 = arith.constant 2 : index
    %c0_9 = arith.constant 0 : index
    %29 = vector.load %arg5[%c2, %c0_9] : memref<8x128xf32, #tpu.memory_space<vmem>>, vector<1x128xf32>
    %c2_i32 = arith.constant 2 : i32
    %30 = vector.broadcast %c2_i32 : i32 to vector<128x1xi32>
    %31 = arith.cmpi eq, %1, %30 : vector<128x1xi32>
    %32 = arith.extui %31 : vector<128x1xi1> to vector<128x1xi32>
    %33 = arith.sitofp %32 : vector<128x1xi32> to vector<128x1xf32>
    %34 = vector.broadcast %33 : vector<128x1xf32> to vector<128x128xf32>
    %35 = vector.broadcast %29 : vector<1x128xf32> to vector<128x128xf32>
    %36 = arith.mulf %34, %35 : vector<128x128xf32>
    %37 = arith.addf %28, %36 : vector<128x128xf32>
    %c0_10 = arith.constant 0 : index
    %c0_11 = arith.constant 0 : index
    %38 = vector.load %arg3[%c0_10, %c0_11] : memref<128x128xf32, #tpu.memory_space<vmem>>, vector<128x128xf32>
    %39 = arith.addf %9, %38 : vector<128x128xf32>
    %40 = arith.addf %39, %37 : vector<128x128xf32>
    %c0_12 = arith.constant 0 : index
    %c0_13 = arith.constant 0 : index
    %41 = vector.load %arg6[%c0_12, %c0_13] : memref<128x128xf32, #tpu.memory_space<vmem>>, vector<128x128xf32>
    tpu.vector_store %arg6[%c0_12, %c0_13], %40 {strides = array<i32>} : memref<128x128xf32, #tpu.memory_space<vmem>>, vector<128x128xf32>,
    return
  }
  func.func @transform_0(%arg0: i32, %arg1: i32) -> (i32, i32) {
    %c1_i32 = arith.constant 1 : i32
    %0 = arith.muli %arg1, %c1_i32 : i32
    %1 = arith.addi %0, %arg0 : i32
    %c0_i32 = arith.constant 0 : i32
    %c0_i32_0 = arith.constant 0 : i32
    return %1, %c0_i32 : i32, i32
  }
  func.func @transform_1(%arg0: i32, %arg1: i32) -> (i32, i32) {
    %c0_i32 = arith.constant 0 : i32
    %c0_i32_0 = arith.constant 0 : i32
    return %arg0, %c0_i32 : i32, i32
  }
  func.func @transform_2(%arg0: i32, %arg1: i32) -> (i32, i32) {
    %c0_i32 = arith.constant 0 : i32
    %c0_i32_0 = arith.constant 0 : i32
    %c0_i32_1 = arith.constant 0 : i32
    return %c0_i32, %c0_i32_0 : i32, i32
  }
  func.func @transform_3(%arg0: i32, %arg1: i32) -> (i32, i32) {
    %c0_i32 = arith.constant 0 : i32
    %c0_i32_0 = arith.constant 0 : i32
    %c0_i32_1 = arith.constant 0 : i32
    return %c0_i32, %c0_i32_0 : i32, i32
  }
  func.func @transform_4(%arg0: i32, %arg1: i32) -> (i32, i32) {
    %c1_i32 = arith.constant 1 : i32
    %0 = arith.muli %arg1, %c1_i32 : i32
    %1 = arith.addi %0, %arg0 : i32
    %c0_i32 = arith.constant 0 : i32
    %c0_i32_0 = arith.constant 0 : i32
    return %1, %c0_i32 : i32, i32
  }
}

</mosaic_0001>

<llo_original>
// kernel: tpu_custom_call.1
$region0: #{tpu_custom_call.1}
  #allocation0 [shape = 'u32[]', space=smem, size = 0x4, offset = 0x4, fixed_abs, tag = 'smem constant byte address 0x4 - core index']
  #allocation1 [shape = 'u32[144,128]{1,0:T(1,128)}', space=vmem, size = 0x12000, scoped, tag = 'internal scratch']
  %s0 = inlined_call_operand.vmem [shape: s32[256,2], index: 0, kind: input, shape index: {}]
  %s1 = inlined_call_operand.hbm [shape: f32[128,128], index: 1, kind: input, shape index: {}]
  %s2 = inlined_call_operand.vmem [shape: bf16[512,128], index: 2, kind: input, shape index: {}]
  %s3 = inlined_call_operand.vmem [shape: f32[8,128], index: 3, kind: input, shape index: {}]
  %s4 = inlined_call_operand.hbm [shape: f32[256,128], index: 4, kind: output, shape index: {}]
  %s5 = sld [smem:[#allocation0]]
  $region53: #{tpu_custom_call.1} parent=0
    _
  %s7 = ssub.s32 1, %s5
  %s8 = scalar_select 0, %s7, %s5
  $region1: #{tpu_custom_call.1} parent=0
    #allocation2 [shape = 'u8[65536]{0}', space=vmem, size = 0x10000, scoped, tag = 'input window, operand 1, single buffered']
    #allocation3 [shape = 's32[2]{0}', space=sflag, size = 0x8, scoped, tag = 'scoped memory for tpu_custom_call.1']
    #allocation4 [shape = 's32[2]{0}', space=sflag, size = 0x8, scoped, tag = 'scoped memory for tpu_custom_call.1']
    #allocation5 [shape = 'u8[131072]{0}', space=vmem, size = 0x20000, scoped, tag = 'output window, operand 0']
    %9 = vsyncpa [#allocation3], 0
    %10 = vsyncpa [#allocation4], 0
    %s11 = scalar_lea.sflag [#allocation4], 1
    %12 = vsyncpa %s11, 0
    loop: start=0, step=1, limit=4
    $region2: #{tpu_custom_call.1} parent=1 // loop_pre_header
      _
    $region3: #{tpu_custom_call.1} parent=1 // loop_header
      %s14 = sphi 0, %s18
      %p15 = scmp.ge.s32.totalorder %s14, 4
      %s21 = sphi 0, %s33
      %s22 = sphi 0, %s29
      %s23 = sphi 0, %s21
      %s24 = sphi 0, %s22
      %s25 = sphi 0, %s23
      %s26 = sphi 0, %s24
      %s38 = sphi 0, %s40
      %s41 = sphi 0, %s38
      %s42 = sphi 0, %s41
      %s58 = sphi 0, %s42
      %s64 = sphi 0, %s66
      %s67 = sphi 0, %s64
      %s68 = sphi 0, %s67
      %s84 = sphi 0, %s68
      %s88 = sphi 0, %s88
      %s90 = sphi 0, %s88
      %s91 = sphi 0, %s90
      %s105 = sphi 0, %s91
      %s109 = sphi 0, %s109
      %s111 = sphi 0, %s109
      %s112 = sphi 0, %s111
      %s126 = sphi 0, %s112
      %s134 = sphi 0, %s136
      %s137 = sphi 0, %s134
      %s138 = sphi 0, %s137
      %s154 = sphi 0, %s138
    $region4: #{tpu_custom_call.1} parent=1 // loop_header_branch
      %17 = sbr.rel (%p15) target = $region8
    $region5: #{tpu_custom_call.1} parent=1 // loop_body
      %s19 = ssub.s32 %s14, 1
      %s20 = ssub.s32 %s14, 2
      %s27 = sadd.s32 1, %s22
      %p28 = scmp.ge.s32.totalorder %s27, 2
      %s29 = scalar_select %p28, 0, %s27
      %s30 = sadd.s32 1, %s21
      %s31 = scalar_select %p28, %s30, %s21
      %p32 = scmp.ge.s32.totalorder %s31, 1
      %s33 = scalar_select %p32, 0, %s31
      %s34 = sadd.s32 %s22, %s21
      %s35 = sadd.s32 %s29, %s33
      %s36 = ssub.s32 %s34, %s35
      %p37 = scmp.eq.s32.totalorder %s36, 0
      %s39 = sadd.s32 %s38, 1
      %s40 = scalar_select %p37, %s38, %s39
      %p43 = pneg %p37
      %p44 = scmp.eq.s32.totalorder %s14, 1
      %p45 = por %p43, %p44
      %p46 = scmp.ne.s32.totalorder %s38, %s41
      %p47 = scmp.eq.s32.totalorder %s14, 0
      %p48 = por %p46, %p47
      %p49 = scmp.ne.s32.totalorder %s38, %s41
      %p50 = scmp.eq.s32.totalorder %s19, 1
      %p51 = por %p49, %p50
      %p52 = scmp.ne.s32.totalorder %s41, %s42
      %p53 = scmp.eq.s32.totalorder %s19, 0
      %p54 = por %p52, %p53
      %p55 = scmp.ne.s32.totalorder %s41, %s42
      %p56 = scmp.eq.s32.totalorder %s20, 1
      %p57 = por %p55, %p56
      %p59 = scmp.ne.s32.totalorder %s42, %s58
      %p60 = scmp.eq.s32.totalorder %s20, 0
      %p61 = por %p59, %p60
      %s62 = ssub.s32 %s21, %s33
      %p63 = scmp.eq.s32.totalorder %s62, 0
      %s65 = sadd.s32 %s64, 1
      %s66 = scalar_select %p63, %s64, %s65
      %p69 = pneg %p63
      %p70 = scmp.eq.s32.totalorder %s14, 1
      %p71 = por %p69, %p70
      %p72 = scmp.ne.s32.totalorder %s64, %s67
      %p73 = scmp.eq.s32.totalorder %s14, 0
      %p74 = por %p72, %p73
      %p75 = scmp.ne.s32.totalorder %s64, %s67
      %p76 = scmp.eq.s32.totalorder %s19, 1
      %p77 = por %p75, %p76
      %p78 = scmp.ne.s32.totalorder %s67, %s68
      %p79 = scmp.eq.s32.totalorder %s19, 0
      %p80 = por %p78, %p79
      %p81 = scmp.ne.s32.totalorder %s67, %s68
      %p82 = scmp.eq.s32.totalorder %s20, 1
      %p83 = por %p81, %p82
      %p85 = scmp.ne.s32.totalorder %s68, %s84
      %p86 = scmp.eq.s32.totalorder %s20, 0
      %p87 = por %p85, %p86
      %s89 = sadd.s32 %s88, 1
      %p92 = scmp.eq.s32.totalorder %s14, 1
      %p93 = scmp.ne.s32.totalorder %s88, %s90
      %p94 = scmp.eq.s32.totalorder %s14, 0
      %p95 = por %p93, %p94
      %p96 = scmp.ne.s32.totalorder %s88, %s90
      %p97 = scmp.eq.s32.totalorder %s19, 1
      %p98 = por %p96, %p97
      %p99 = scmp.ne.s32.totalorder %s90, %s91
      %p100 = scmp.eq.s32.totalorder %s19, 0
      %p101 = por %p99, %p100
      %p102 = scmp.ne.s32.totalorder %s90, %s91
      %p103 = scmp.eq.s32.totalorder %s20, 1
      %p104 = por %p102, %p103
      %p106 = scmp.ne.s32.totalorder %s91, %s105
      %p107 = scmp.eq.s32.totalorder %s20, 0
      %p108 = por %p106, %p107
      %s110 = sadd.s32 %s109, 1
      %p113 = scmp.eq.s32.totalorder %s14, 1
      %p114 = scmp.ne.s32.totalorder %s109, %s111
      %p115 = scmp.eq.s32.totalorder %s14, 0
      %p116 = por %p114, %p115
      %p117 = scmp.ne.s32.totalorder %s109, %s111
      %p118 = scmp.eq.s32.totalorder %s19, 1
      %p119 = por %p117, %p118
      %p120 = scmp.ne.s32.totalorder %s111, %s112
      %p121 = scmp.eq.s32.totalorder %s19, 0
      %p122 = por %p120, %p121
      %p123 = scmp.ne.s32.totalorder %s111, %s112
      %p124 = scmp.eq.s32.totalorder %s20, 1
      %p125 = por %p123, %p124
      %p127 = scmp.ne.s32.totalorder %s112, %s126
      %p128 = scmp.eq.s32.totalorder %s20, 0
      %p129 = por %p127, %p128
      %s130 = sadd.s32 %s22, %s21
      %s131 = sadd.s32 %s29, %s33
      %s132 = ssub.s32 %s130, %s131
      %p133 = scmp.eq.s32.totalorder %s132, 0
      %s135 = sadd.s32 %s134, 1
      %s136 = scalar_select %p133, %s134, %s135
      %p139 = pneg %p133
      %p140 = scmp.eq.s32.totalorder %s14, 1
      %p141 = por %p139, %p140
      %p142 = scmp.ne.s32.totalorder %s134, %s137
      %p143 = scmp.eq.s32.totalorder %s14, 0
      %p144 = por %p142, %p143
      %p145 = scmp.ne.s32.totalorder %s134, %s137
      %p146 = scmp.eq.s32.totalorder %s19, 1
      %p147 = por %p145, %p146
      %p148 = scmp.ne.s32.totalorder %s137, %s138
      %p149 = scmp.eq.s32.totalorder %s19, 0
      %p150 = por %p148, %p149
      %p151 = scmp.ne.s32.totalorder %s137, %s138
      %p152 = scmp.eq.s32.totalorder %s20, 1
      %p153 = por %p151, %p152
      %p155 = scmp.ne.s32.totalorder %s138, %s154
      %p156 = scmp.eq.s32.totalorder %s20, 0
      %p157 = por %p155, %p156
      %p158 = scmp.le.s32.totalorder 1, %s14
      %p159 = scmp.lt.s32.totalorder %s14, 3
      %p160 = pnand %p158, %p159
      %p161 = pneg %p160
      // Predicated region
      $region9: #{tpu_custom_call.1} parent=5 // pred_check
        _
      $region10: #{tpu_custom_call.1} parent=5 // pred_check_branch
        %163 = sbr.rel (%p160) target = $region12
      $region11: #{tpu_custom_call.1} parent=5 // pred_region
        %s164 = ssub.s32 %s14, 1
        // Predicated region
        $region13: #{tpu_custom_call.1} parent=11 // pred_check
          %p165 = pneg %p80
        $region14: #{tpu_custom_call.1} parent=11 // pred_check_branch
          %167 = sbr.rel (%p165) target = $region16
        $region15: #{tpu_custom_call.1} parent=11 // pred_region
          %s168 = smul.u32 16, %s23
          %s170 = ssub.s32 2048, 2048
          %171 = vsyncadd [#allocation3], %s170
          %s172 = smul.addr %s168, 128
          %s173 = scalar_lea.hbm %s1, %s172
          %s174 = sshll.u32 [#allocation2], 4
          %s175 = int_to_ptr.vmem [resolvable:$true] %s174
          %180 = dma.hbm_to_vmem [thread:$0]  %s173, 2048, %s175, [#allocation3], 128, 128, 8
        $region16: #{tpu_custom_call.1} parent=11 // pred_fallthru
          _
        // Predicated region
        $region17: #{tpu_custom_call.1} parent=11 // pred_check
          %p181 = pneg %p101
        $region18: #{tpu_custom_call.1} parent=11 // pred_check_branch
          %183 = sbr.rel (%p181) target = $region20
        $region19: #{tpu_custom_call.1} parent=11 // pred_region
          _
        $region20: #{tpu_custom_call.1} parent=11 // pred_fallthru
          _
        // Predicated region
        $region21: #{tpu_custom_call.1} parent=11 // pred_check
          %p184 = pneg %p122
        $region22: #{tpu_custom_call.1} parent=11 // pred_check_branch
          %186 = sbr.rel (%p184) target = $region24
        $region23: #{tpu_custom_call.1} parent=11 // pred_region
          _
        $region24: #{tpu_custom_call.1} parent=11 // pred_fallthru
          _
      $region12: #{tpu_custom_call.1} parent=5 // pred_fallthru
        _
      %p187 = scmp.lt.s32.totalorder %s14, 2
      // Predicated region
      $region25: #{tpu_custom_call.1} parent=5 // pred_check
        %p188 = pneg %p187
      $region26: #{tpu_custom_call.1} parent=5 // pred_check_branch
        %190 = sbr.rel (%p188) target = $region28
      $region27: #{tpu_custom_call.1} parent=5 // pred_region
        // Predicated region
        $region29: #{tpu_custom_call.1} parent=27 // pred_check
          %p191 = pneg %p48
        $region30: #{tpu_custom_call.1} parent=27 // pred_check_branch
          %193 = sbr.rel (%p191) target = $region32
        $region31: #{tpu_custom_call.1} parent=27 // pred_region
          %s194 = sadd.s32 %s22, %s21
          %s195 = smul.u32 16, %s194
          %p196 = scmp.lt.s32.totalorder %s195, 31
          %s197 = scalar_select %p196, %s195, 31
          %s198 = smul.addr %s197, 8
          %s199 = scalar_lea.vmem %s0, %s198
          %s200 = sadd.s32 %s22, %s21
          %s201 = smul.u32 16, %s200
        $region32: #{tpu_custom_call.1} parent=27 // pred_fallthru
          _
      $region28: #{tpu_custom_call.1} parent=5 // pred_fallthru
        _
      %p202 = scmp.le.s32.totalorder 1, %s14
      %p203 = scmp.lt.s32.totalorder %s14, 3
      %p204 = pnand %p202, %p203
      %p205 = pneg %p204
      // Predicated region
      $region33: #{tpu_custom_call.1} parent=5 // pred_check
        _
      $region34: #{tpu_custom_call.1} parent=5 // pred_check_branch
        %207 = sbr.rel (%p204) target = $region36
      $region35: #{tpu_custom_call.1} parent=5 // pred_region
        %s208 = ssub.s32 %s14, 1
        // Predicated region
        $region37: #{tpu_custom_call.1} parent=35 // pred_check
          %p209 = pneg %p80
        $region38: #{tpu_custom_call.1} parent=35 // pred_check_branch
          %211 = sbr.rel (%p209) target = $region40
        $region39: #{tpu_custom_call.1} parent=35 // pred_region
          %212 = dma.done [#allocation3], 2048
        $region40: #{tpu_custom_call.1} parent=35 // pred_fallthru
          _
        %s213 = sadd.s32 %s24, %s23
        %s214 = smul.u32 16, %s213
        %p215 = scmp.lt.s32.totalorder %s214, 31
        %s216 = scalar_select %p215, %s214, 31
        %s217 = smul.addr %s216, 8
        %s218 = scalar_lea.vmem %s0, %s217
        %p219 = pneg %p54
        %p220 = pneg %p51
        %p221 = pneg %p80
        %p222 = pneg %p77
        %p223 = pneg %p101
        %p224 = pneg %p98
        %p225 = pneg %p122
        %p226 = pneg %p119
        %p227 = pneg %p150
        %p228 = pneg %p147
        %s229 = sand.u32 %s137, 1
        %s230 = scalar_lea.sflag [#allocation4], %s229
        %s231 = sand.u32 %s137, 1
        %s232 = smul.addr %s231, 128
        %s233 = scalar_lea.vmem [#allocation5], %s232
        %s234 = sadd.s32 %s24, %s23
        %s235 = smul.u32 16, %s234
        %p236 = scmp.lt.s32.totalorder %s235, 31
        %s237 = scalar_select %p236, %s235, 31
        %s238 = smul.addr %s237, 8
        %s239 = scalar_lea.vmem %s0, %s238
        %s240 = sadd.s32 %s24, %s23
        %s241 = smul.u32 16, %s240
        %s242 = smul.u32 16, %s23
        %s243 = sadd.s32 %s24, %s23
        %s244 = smul.u32 16, %s243
        %v246 = vld [vmem:[%s239] sm:$0xff]
        %v247 = vld [vmem:[%s239 + $0x8] sm:$0xff]
        %v248 = vld [vmem:[%s239 + $0x10] sm:$0xff]
        %v249 = vld [vmem:[%s239 + $0x18] sm:$0xff]
        %v250 = vld [vmem:[%s239 + $0x20] sm:$0xff]
        %v251 = vld [vmem:[%s239 + $0x28] sm:$0xff]
        %v252 = vld [vmem:[%s239 + $0x30] sm:$0xff]
        %v253 = vld [vmem:[%s239 + $0x38] sm:$0xff]
        %v254 = vld [vmem:[%s239 + $0x40] sm:$0xff]
        %v255 = vld [vmem:[%s239 + $0x48] sm:$0xff]
        %v256 = vld [vmem:[%s239 + $0x50] sm:$0xff]
        %v257 = vld [vmem:[%s239 + $0x58] sm:$0xff]
        %v258 = vld [vmem:[%s239 + $0x60] sm:$0xff]
        %v259 = vld [vmem:[%s239 + $0x68] sm:$0xff]
        %v260 = vld [vmem:[%s239 + $0x70] sm:$0xff]
        %v261 = vld [vmem:[%s239 + $0x78] sm:$0xff]
        %v262 = vlaneseq
        %v263 = vand.u32 %v262, 127
        %v264 = vadd.s32 %v263, 128
        %v265 = vadd.s32 %v263, 256
        %v266 = vadd.s32 %v263, 384
        %267 = vset.pattern.permute.xlu0 0
        %268 = vperm.xlu0 %267, %v246
        %v269 = vpop.permute.xlu0 %268
        %270 = vset.pattern.permute.xlu0 0
        %271 = vperm.xlu0 %270, %v247
        %v272 = vpop.permute.xlu0 %271
        %273 = vset.pattern.permute.xlu0 0
        %274 = vperm.xlu0 %273, %v248
        %v275 = vpop.permute.xlu0 %274
        %276 = vset.pattern.permute.xlu0 0
        %277 = vperm.xlu0 %276, %v249
        %v278 = vpop.permute.xlu0 %277
        %279 = vset.pattern.permute.xlu0 0
        %280 = vperm.xlu0 %279, %v250
        %v281 = vpop.permute.xlu0 %280
        %282 = vset.pattern.permute.xlu0 0
        %283 = vperm.xlu0 %282, %v251
        %v284 = vpop.permute.xlu0 %283
        %285 = vset.pattern.permute.xlu0 0
        %286 = vperm.xlu0 %285, %v252
        %v287 = vpop.permute.xlu0 %286
        %288 = vset.pattern.permute.xlu0 0
        %289 = vperm.xlu0 %288, %v253
        %v290 = vpop.permute.xlu0 %289
        %291 = vset.pattern.permute.xlu0 0
        %292 = vperm.xlu0 %291, %v254
        %v293 = vpop.permute.xlu0 %292
        %294 = vset.pattern.permute.xlu0 0
        %295 = vperm.xlu0 %294, %v255
        %v296 = vpop.permute.xlu0 %295
        %297 = vset.pattern.permute.xlu0 0
        %298 = vperm.xlu0 %297, %v256
        %v299 = vpop.permute.xlu0 %298
        %300 = vset.pattern.permute.xlu0 0
        %301 = vperm.xlu0 %300, %v257
        %v302 = vpop.permute.xlu0 %301
        %303 = vset.pattern.permute.xlu0 0
        %304 = vperm.xlu0 %303, %v258
        %v305 = vpop.permute.xlu0 %304
        %306 = vset.pattern.permute.xlu0 0
        %307 = vperm.xlu0 %306, %v259
        %v308 = vpop.permute.xlu0 %307
        %309 = vset.pattern.permute.xlu0 0
        %310 = vperm.xlu0 %309, %v260
        %v311 = vpop.permute.xlu0 %310
        %312 = vset.pattern.permute.xlu0 0
        %313 = vperm.xlu0 %312, %v261
        %v314 = vpop.permute.xlu0 %313
        %vm315 = vcmp.eq.s32.totalorder %v263, %v269
        %vm316 = vcmp.eq.s32.totalorder %v264, %v269
        %vm317 = vcmp.eq.s32.totalorder %v265, %v269
        %vm318 = vcmp.eq.s32.totalorder %v266, %v269
        %vm319 = vcmp.eq.s32.totalorder %v263, %v272
        %vm320 = vcmp.eq.s32.totalorder %v264, %v272
        %vm321 = vcmp.eq.s32.totalorder %v265, %v272
        %vm322 = vcmp.eq.s32.totalorder %v266, %v272
        %vm323 = vcmp.eq.s32.totalorder %v263, %v275
        %vm324 = vcmp.eq.s32.totalorder %v264, %v275
        %vm325 = vcmp.eq.s32.totalorder %v265, %v275
        %vm326 = vcmp.eq.s32.totalorder %v266, %v275
        %vm327 = vcmp.eq.s32.totalorder %v263, %v278
        %vm328 = vcmp.eq.s32.totalorder %v264, %v278
        %vm329 = vcmp.eq.s32.totalorder %v265, %v278
        %vm330 = vcmp.eq.s32.totalorder %v266, %v278
        %vm331 = vcmp.eq.s32.totalorder %v263, %v281
        %vm332 = vcmp.eq.s32.totalorder %v264, %v281
        %vm333 = vcmp.eq.s32.totalorder %v265, %v281
        %vm334 = vcmp.eq.s32.totalorder %v266, %v281
        %vm335 = vcmp.eq.s32.totalorder %v263, %v284
        %vm336 = vcmp.eq.s32.totalorder %v264, %v284
        %vm337 = vcmp.eq.s32.totalorder %v265, %v284
        %vm338 = vcmp.eq.s32.totalorder %v266, %v284
        %vm339 = vcmp.eq.s32.totalorder %v263, %v287
        %vm340 = vcmp.eq.s32.totalorder %v264, %v287
        %vm341 = vcmp.eq.s32.totalorder %v265, %v287
        %vm342 = vcmp.eq.s32.totalorder %v266, %v287
        %vm343 = vcmp.eq.s32.totalorder %v263, %v290
        %vm344 = vcmp.eq.s32.totalorder %v264, %v290
        %vm345 = vcmp.eq.s32.totalorder %v265, %v290
        %vm346 = vcmp.eq.s32.totalorder %v266, %v290
        %vm347 = vcmp.eq.s32.totalorder %v263, %v293
        %vm348 = vcmp.eq.s32.totalorder %v264, %v293
        %vm349 = vcmp.eq.s32.totalorder %v265, %v293
        %vm350 = vcmp.eq.s32.totalorder %v266, %v293
        %vm351 = vcmp.eq.s32.totalorder %v263, %v296
        %vm352 = vcmp.eq.s32.totalorder %v264, %v296
        %vm353 = vcmp.eq.s32.totalorder %v265, %v296
        %vm354 = vcmp.eq.s32.totalorder %v266, %v296
        %vm355 = vcmp.eq.s32.totalorder %v263, %v299
        %vm356 = vcmp.eq.s32.totalorder %v264, %v299
        %vm357 = vcmp.eq.s32.totalorder %v265, %v299
        %vm358 = vcmp.eq.s32.totalorder %v266, %v299
        %vm359 = vcmp.eq.s32.totalorder %v263, %v302
        %vm360 = vcmp.eq.s32.totalorder %v264, %v302
        %vm361 = vcmp.eq.s32.totalorder %v265, %v302
        %vm362 = vcmp.eq.s32.totalorder %v266, %v302
        %vm363 = vcmp.eq.s32.totalorder %v263, %v305
        %vm364 = vcmp.eq.s32.totalorder %v264, %v305
        %vm365 = vcmp.eq.s32.totalorder %v265, %v305
        %vm366 = vcmp.eq.s32.totalorder %v266, %v305
        %vm367 = vcmp.eq.s32.totalorder %v263, %v308
        %vm368 = vcmp.eq.s32.totalorder %v264, %v308
        %vm369 = vcmp.eq.s32.totalorder %v265, %v308
        %vm370 = vcmp.eq.s32.totalorder %v266, %v308
        %vm371 = vcmp.eq.s32.totalorder %v263, %v311
        %vm372 = vcmp.eq.s32.totalorder %v264, %v311
        %vm373 = vcmp.eq.s32.totalorder %v265, %v311
        %vm374 = vcmp.eq.s32.totalorder %v266, %v311
        %vm375 = vcmp.eq.s32.totalorder %v263, %v314
        %vm376 = vcmp.eq.s32.totalorder %v264, %v314
        %vm377 = vcmp.eq.s32.totalorder %v265, %v314
        %vm378 = vcmp.eq.s32.totalorder %v266, %v314
        %v379 = vsel %vm315, 1, 0
        %v380 = vsel %vm316, 1, 0
        %v381 = vsel %vm317, 1, 0
        %v382 = vsel %vm318, 1, 0
        %v383 = vsel %vm319, 1, 0
        %v384 = vsel %vm320, 1, 0
        %v385 = vsel %vm321, 1, 0
        %v386 = vsel %vm322, 1, 0
        %v387 = vsel %vm323, 1, 0
        %v388 = vsel %vm324, 1, 0
        %v389 = vsel %vm325, 1, 0
        %v390 = vsel %vm326, 1, 0
        %v391 = vsel %vm327, 1, 0
        %v392 = vsel %vm328, 1, 0
        %v393 = vsel %vm329, 1, 0
        %v394 = vsel %vm330, 1, 0
        %v395 = vsel %vm331, 1, 0
        %v396 = vsel %vm332, 1, 0
        %v397 = vsel %vm333, 1, 0
        %v398 = vsel %vm334, 1, 0
        %v399 = vsel %vm335, 1, 0
        %v400 = vsel %vm336, 1, 0
        %v401 = vsel %vm337, 1, 0
        %v402 = vsel %vm338, 1, 0
        %v403 = vsel %vm339, 1, 0
        %v404 = vsel %vm340, 1, 0
        %v405 = vsel %vm341, 1, 0
        %v406 = vsel %vm342, 1, 0
        %v407 = vsel %vm343, 1, 0
        %v408 = vsel %vm344, 1, 0
        %v409 = vsel %vm345, 1, 0
        %v410 = vsel %vm346, 1, 0
        %v411 = vsel %vm347, 1, 0
        %v412 = vsel %vm348, 1, 0
        %v413 = vsel %vm349, 1, 0
        %v414 = vsel %vm350, 1, 0
        %v415 = vsel %vm351, 1, 0
        %v416 = vsel %vm352, 1, 0
        %v417 = vsel %vm353, 1, 0
        %v418 = vsel %vm354, 1, 0
        %v419 = vsel %vm355, 1, 0
        %v420 = vsel %vm356, 1, 0
        %v421 = vsel %vm357, 1, 0
        %v422 = vsel %vm358, 1, 0
        %v423 = vsel %vm359, 1, 0
        %v424 = vsel %vm360, 1, 0
        %v425 = vsel %vm361, 1, 0
        %v426 = vsel %vm362, 1, 0
        %v427 = vsel %vm363, 1, 0
        %v428 = vsel %vm364, 1, 0
        %v429 = vsel %vm365, 1, 0
        %v430 = vsel %vm366, 1, 0
        %v431 = vsel %vm367, 1, 0
        %v432 = vsel %vm368, 1, 0
        %v433 = vsel %vm369, 1, 0
        %v434 = vsel %vm370, 1, 0
        %v435 = vsel %vm371, 1, 0
        %v436 = vsel %vm372, 1, 0
        %v437 = vsel %vm373, 1, 0
        %v438 = vsel %vm374, 1, 0
        %v439 = vsel %vm375, 1, 0
        %v440 = vsel %vm376, 1, 0
        %v441 = vsel %vm377, 1, 0
        %v442 = vsel %vm378, 1, 0
        %v443 = vcvt.s32.f32 %v379
        %v444 = vcvt.s32.f32 %v380
        %v445 = vcvt.s32.f32 %v381
        %v446 = vcvt.s32.f32 %v382
        %v447 = vcvt.s32.f32 %v383
        %v448 = vcvt.s32.f32 %v384
        %v449 = vcvt.s32.f32 %v385
        %v450 = vcvt.s32.f32 %v386
        %v451 = vcvt.s32.f32 %v387
        %v452 = vcvt.s32.f32 %v388
        %v453 = vcvt.s32.f32 %v389
        %v454 = vcvt.s32.f32 %v390
        %v455 = vcvt.s32.f32 %v391
        %v456 = vcvt.s32.f32 %v392
        %v457 = vcvt.s32.f32 %v393
        %v458 = vcvt.s32.f32 %v394
        %v459 = vcvt.s32.f32 %v395
        %v460 = vcvt.s32.f32 %v396
        %v461 = vcvt.s32.f32 %v397
        %v462 = vcvt.s32.f32 %v398
        %v463 = vcvt.s32.f32 %v399
        %v464 = vcvt.s32.f32 %v400
        %v465 = vcvt.s32.f32 %v401
        %v466 = vcvt.s32.f32 %v402
        %v467 = vcvt.s32.f32 %v403
        %v468 = vcvt.s32.f32 %v404
        %v469 = vcvt.s32.f32 %v405
        %v470 = vcvt.s32.f32 %v406
        %v471 = vcvt.s32.f32 %v407
        %v472 = vcvt.s32.f32 %v408
        %v473 = vcvt.s32.f32 %v409
        %v474 = vcvt.s32.f32 %v410
        %v475 = vcvt.s32.f32 %v411
        %v476 = vcvt.s32.f32 %v412
        %v477 = vcvt.s32.f32 %v413
        %v478 = vcvt.s32.f32 %v414
        %v479 = vcvt.s32.f32 %v415
        %v480 = vcvt.s32.f32 %v416
        %v481 = vcvt.s32.f32 %v417
        %v482 = vcvt.s32.f32 %v418
        %v483 = vcvt.s32.f32 %v419
        %v484 = vcvt.s32.f32 %v420
        %v485 = vcvt.s32.f32 %v421
        %v486 = vcvt.s32.f32 %v422
        %v487 = vcvt.s32.f32 %v423
        %v488 = vcvt.s32.f32 %v424
        %v489 = vcvt.s32.f32 %v425
        %v490 = vcvt.s32.f32 %v426
        %v491 = vcvt.s32.f32 %v427
        %v492 = vcvt.s32.f32 %v428
        %v493 = vcvt.s32.f32 %v429
        %v494 = vcvt.s32.f32 %v430
        %v495 = vcvt.s32.f32 %v431
        %v496 = vcvt.s32.f32 %v432
        %v497 = vcvt.s32.f32 %v433
        %v498 = vcvt.s32.f32 %v434
        %v499 = vcvt.s32.f32 %v435
        %v500 = vcvt.s32.f32 %v436
        %v501 = vcvt.s32.f32 %v437
        %v502 = vcvt.s32.f32 %v438
        %v503 = vcvt.s32.f32 %v439
        %v504 = vcvt.s32.f32 %v440
        %v505 = vcvt.s32.f32 %v441
        %v506 = vcvt.s32.f32 %v442
        %v507 = vpack.c.bf16 %v447, %v443
        %v508 = vpack.c.bf16 %v448, %v444
        %v509 = vpack.c.bf16 %v449, %v445
        %v510 = vpack.c.bf16 %v450, %v446
        %v511 = vpack.c.bf16 %v455, %v451
        %v512 = vpack.c.bf16 %v456, %v452
        %v513 = vpack.c.bf16 %v457, %v453
        %v514 = vpack.c.bf16 %v458, %v454
        %v515 = vpack.c.bf16 %v463, %v459
        %v516 = vpack.c.bf16 %v464, %v460
        %v517 = vpack.c.bf16 %v465, %v461
        %v518 = vpack.c.bf16 %v466, %v462
        %v519 = vpack.c.bf16 %v471, %v467
        %v520 = vpack.c.bf16 %v472, %v468
        %v521 = vpack.c.bf16 %v473, %v469
        %v522 = vpack.c.bf16 %v474, %v470
        %v523 = vpack.c.bf16 %v479, %v475
        %v524 = vpack.c.bf16 %v480, %v476
        %v525 = vpack.c.bf16 %v481, %v477
        %v526 = vpack.c.bf16 %v482, %v478
        %v527 = vpack.c.bf16 %v487, %v483
        %v528 = vpack.c.bf16 %v488, %v484
        %v529 = vpack.c.bf16 %v489, %v485
        %v530 = vpack.c.bf16 %v490, %v486
        %v531 = vpack.c.bf16 %v495, %v491
        %v532 = vpack.c.bf16 %v496, %v492
        %v533 = vpack.c.bf16 %v497, %v493
        %v534 = vpack.c.bf16 %v498, %v494
        %v535 = vpack.c.bf16 %v503, %v499
        %v536 = vpack.c.bf16 %v504, %v500
        %v537 = vpack.c.bf16 %v505, %v501
        %v538 = vpack.c.bf16 %v506, %v502
        %v539 = vld [vmem:[%s2] sm:$0xf]
        %v540 = vld [vmem:[%s2 + $0x4] sm:$0xf]
        %v541 = vld [vmem:[%s2 + $0x8] sm:$0xf]
        %v542 = vld [vmem:[%s2 + $0xc] sm:$0xf]
        %v543 = vld [vmem:[%s2 + $0x10] sm:$0xf]
        %v544 = vld [vmem:[%s2 + $0x14] sm:$0xf]
        %v545 = vld [vmem:[%s2 + $0x18] sm:$0xf]
        %v546 = vld [vmem:[%s2 + $0x1c] sm:$0xf]
        %v547 = vld [vmem:[%s2 + $0x20] sm:$0xf]
        %v548 = vld [vmem:[%s2 + $0x24] sm:$0xf]
        %v549 = vld [vmem:[%s2 + $0x28] sm:$0xf]
        %v550 = vld [vmem:[%s2 + $0x2c] sm:$0xf]
        %v551 = vld [vmem:[%s2 + $0x30] sm:$0xf]
        %v552 = vld [vmem:[%s2 + $0x34] sm:$0xf]
        %v553 = vld [vmem:[%s2 + $0x38] sm:$0xf]
        %v554 = vld [vmem:[%s2 + $0x3c] sm:$0xf]
        %v555 = vld [vmem:[%s2 + $0x40] sm:$0xf]
        %v556 = vld [vmem:[%s2 + $0x44] sm:$0xf]
        %v557 = vld [vmem:[%s2 + $0x48] sm:$0xf]
        %v558 = vld [vmem:[%s2 + $0x4c] sm:$0xf]
        %v559 = vld [vmem:[%s2 + $0x50] sm:$0xf]
        %v560 = vld [vmem:[%s2 + $0x54] sm:$0xf]
        %v561 = vld [vmem:[%s2 + $0x58] sm:$0xf]
        %v562 = vld [vmem:[%s2 + $0x5c] sm:$0xf]
        %v563 = vld [vmem:[%s2 + $0x60] sm:$0xf]
        %v564 = vld [vmem:[%s2 + $0x64] sm:$0xf]
        %v565 = vld [vmem:[%s2 + $0x68] sm:$0xf]
        %v566 = vld [vmem:[%s2 + $0x6c] sm:$0xf]
        %v567 = vld [vmem:[%s2 + $0x70] sm:$0xf]
        %v568 = vld [vmem:[%s2 + $0x74] sm:$0xf]
        %v569 = vld [vmem:[%s2 + $0x78] sm:$0xf]
        %v570 = vld [vmem:[%s2 + $0x7c] sm:$0xf]
        %v571 = vld [vmem:[%s2 + $0x80] sm:$0xf]
        %v572 = vld [vmem:[%s2 + $0x84] sm:$0xf]
        %v573 = vld [vmem:[%s2 + $0x88] sm:$0xf]
        %v574 = vld [vmem:[%s2 + $0x8c] sm:$0xf]
        %v575 = vld [vmem:[%s2 + $0x90] sm:$0xf]
        %v576 = vld [vmem:[%s2 + $0x94] sm:$0xf]
        %v577 = vld [vmem:[%s2 + $0x98] sm:$0xf]
        %v578 = vld [vmem:[%s2 + $0x9c] sm:$0xf]
        %v579 = vld [vmem:[%s2 + $0xa0] sm:$0xf]
        %v580 = vld [vmem:[%s2 + $0xa4] sm:$0xf]
        %v581 = vld [vmem:[%s2 + $0xa8] sm:$0xf]
        %v582 = vld [vmem:[%s2 + $0xac] sm:$0xf]
        %v583 = vld [vmem:[%s2 + $0xb0] sm:$0xf]
        %v584 = vld [vmem:[%s2 + $0xb4] sm:$0xf]
        %v585 = vld [vmem:[%s2 + $0xb8] sm:$0xf]
        %v586 = vld [vmem:[%s2 + $0xbc] sm:$0xf]
        %v587 = vld [vmem:[%s2 + $0xc0] sm:$0xf]
        %v588 = vld [vmem:[%s2 + $0xc4] sm:$0xf]
        %v589 = vld [vmem:[%s2 + $0xc8] sm:$0xf]
        %v590 = vld [vmem:[%s2 + $0xcc] sm:$0xf]
        %v591 = vld [vmem:[%s2 + $0xd0] sm:$0xf]
        %v592 = vld [vmem:[%s2 + $0xd4] sm:$0xf]
        %v593 = vld [vmem:[%s2 + $0xd8] sm:$0xf]
        %v594 = vld [vmem:[%s2 + $0xdc] sm:$0xf]
        %v595 = vld [vmem:[%s2 + $0xe0] sm:$0xf]
        %v596 = vld [vmem:[%s2 + $0xe4] sm:$0xf]
        %v597 = vld [vmem:[%s2 + $0xe8] sm:$0xf]
        %v598 = vld [vmem:[%s2 + $0xec] sm:$0xf]
        %v599 = vld [vmem:[%s2 + $0xf0] sm:$0xf]
        %v600 = vld [vmem:[%s2 + $0xf4] sm:$0xf]
        %v601 = vld [vmem:[%s2 + $0xf8] sm:$0xf]
        %v602 = vld [vmem:[%s2 + $0xfc] sm:$0xf]
        %v603 = vld [vmem:[%s3] sm:$0x1]
        %vm604 = vcmp.eq.s32.totalorder %v246, 0
        %vm605 = vcmp.eq.s32.totalorder %v247, 0
        %vm606 = vcmp.eq.s32.totalorder %v248, 0
        %vm607 = vcmp.eq.s32.totalorder %v249, 0
        %vm608 = vcmp.eq.s32.totalorder %v250, 0
        %vm609 = vcmp.eq.s32.totalorder %v251, 0
        %vm610 = vcmp.eq.s32.totalorder %v252, 0
        %vm611 = vcmp.eq.s32.totalorder %v253, 0
        %vm612 = vcmp.eq.s32.totalorder %v254, 0
        %vm613 = vcmp.eq.s32.totalorder %v255, 0
        %vm614 = vcmp.eq.s32.totalorder %v256, 0
        %vm615 = vcmp.eq.s32.totalorder %v257, 0
        %vm616 = vcmp.eq.s32.totalorder %v258, 0
        %vm617 = vcmp.eq.s32.totalorder %v259, 0
        %vm618 = vcmp.eq.s32.totalorder %v260, 0
        %vm619 = vcmp.eq.s32.totalorder %v261, 0
        %v620 = vsel %vm604, 1, 0
        %v621 = vsel %vm605, 1, 0
        %v622 = vsel %vm606, 1, 0
        %v623 = vsel %vm607, 1, 0
        %v624 = vsel %vm608, 1, 0
        %v625 = vsel %vm609, 1, 0
        %v626 = vsel %vm610, 1, 0
        %v627 = vsel %vm611, 1, 0
        %v628 = vsel %vm612, 1, 0
        %v629 = vsel %vm613, 1, 0
        %v630 = vsel %vm614, 1, 0
        %v631 = vsel %vm615, 1, 0
        %v632 = vsel %vm616, 1, 0
        %v633 = vsel %vm617, 1, 0
        %v634 = vsel %vm618, 1, 0
        %v635 = vsel %vm619, 1, 0
        %v636 = vcvt.s32.f32 %v620
        %v637 = vcvt.s32.f32 %v621
        %v638 = vcvt.s32.f32 %v622
        %v639 = vcvt.s32.f32 %v623
        %v640 = vcvt.s32.f32 %v624
        %v641 = vcvt.s32.f32 %v625
        %v642 = vcvt.s32.f32 %v626
        %v643 = vcvt.s32.f32 %v627
        %v644 = vcvt.s32.f32 %v628
        %v645 = vcvt.s32.f32 %v629
        %v646 = vcvt.s32.f32 %v630
        %v647 = vcvt.s32.f32 %v631
        %v648 = vcvt.s32.f32 %v632
        %v649 = vcvt.s32.f32 %v633
        %v650 = vcvt.s32.f32 %v634
        %v651 = vcvt.s32.f32 %v635
        %653 = vset.pattern.permute.xlu0 1
        %654 = vperm.xlu0 %653, %v636
        %v655 = vpop.permute.xlu0 %654
        %658 = vset.pattern.permute.xlu0 1
        %659 = vperm.xlu0 %658, %v637
        %v660 = vpop.permute.xlu0 %659
        %663 = vset.pattern.permute.xlu0 1
        %664 = vperm.xlu0 %663, %v638
        %v665 = vpop.permute.xlu0 %664
        %668 = vset.pattern.permute.xlu0 1
        %669 = vperm.xlu0 %668, %v639
        %v670 = vpop.permute.xlu0 %669
        %673 = vset.pattern.permute.xlu0 1
        %674 = vperm.xlu0 %673, %v640
        %v675 = vpop.permute.xlu0 %674
        %678 = vset.pattern.permute.xlu0 1
        %679 = vperm.xlu0 %678, %v641
        %v680 = vpop.permute.xlu0 %679
        %683 = vset.pattern.permute.xlu0 1
        %684 = vperm.xlu0 %683, %v642
        %v685 = vpop.permute.xlu0 %684
        %688 = vset.pattern.permute.xlu0 1
        %689 = vperm.xlu0 %688, %v643
        %v690 = vpop.permute.xlu0 %689
        %693 = vset.pattern.permute.xlu0 1
        %694 = vperm.xlu0 %693, %v644
        %v695 = vpop.permute.xlu0 %694
        %698 = vset.pattern.permute.xlu0 1
        %699 = vperm.xlu0 %698, %v645
        %v700 = vpop.permute.xlu0 %699
        %703 = vset.pattern.permute.xlu0 1
        %704 = vperm.xlu0 %703, %v646
        %v705 = vpop.permute.xlu0 %704
        %708 = vset.pattern.permute.xlu0 1
        %709 = vperm.xlu0 %708, %v647
        %v710 = vpop.permute.xlu0 %709
        %713 = vset.pattern.permute.xlu0 1
        %714 = vperm.xlu0 %713, %v648
        %v715 = vpop.permute.xlu0 %714
        %718 = vset.pattern.permute.xlu0 1
        %719 = vperm.xlu0 %718, %v649
        %v720 = vpop.permute.xlu0 %719
        %723 = vset.pattern.permute.xlu0 1
        %724 = vperm.xlu0 %723, %v650
        %v725 = vpop.permute.xlu0 %724
        %728 = vset.pattern.permute.xlu0 1
        %729 = vperm.xlu0 %728, %v651
        %v730 = vpop.permute.xlu0 %729
        %v732 = vlaneseq
        %v733 = vshrl.u32 %v732, 7
        %v734 = vsub.s32 0, %v733
        %v735 = vrot.slane %v603, %v734
        %v736 = vmul.f32 %v655, %v735
        %v737 = vmul.f32 %v660, %v735
        %v738 = vmul.f32 %v665, %v735
        %v739 = vmul.f32 %v670, %v735
        %v740 = vmul.f32 %v675, %v735
        %v741 = vmul.f32 %v680, %v735
        %v742 = vmul.f32 %v685, %v735
        %v743 = vmul.f32 %v690, %v735
        %v744 = vmul.f32 %v695, %v735
        %v745 = vmul.f32 %v700, %v735
        %v746 = vmul.f32 %v705, %v735
        %v747 = vmul.f32 %v710, %v735
        %v748 = vmul.f32 %v715, %v735
        %v749 = vmul.f32 %v720, %v735
        %v750 = vmul.f32 %v725, %v735
        %v751 = vmul.f32 %v730, %v735
        %v752 = vadd.f32 %v736, 0.0
        %v753 = vadd.f32 %v737, 0.0
        %v754 = vadd.f32 %v738, 0.0
        %v755 = vadd.f32 %v739, 0.0
        %v756 = vadd.f32 %v740, 0.0
        %v757 = vadd.f32 %v741, 0.0
        %v758 = vadd.f32 %v742, 0.0
        %v759 = vadd.f32 %v743, 0.0
        %v760 = vadd.f32 %v744, 0.0
        %v761 = vadd.f32 %v745, 0.0
        %v762 = vadd.f32 %v746, 0.0
        %v763 = vadd.f32 %v747, 0.0
        %v764 = vadd.f32 %v748, 0.0
        %v765 = vadd.f32 %v749, 0.0
        %v766 = vadd.f32 %v750, 0.0
        %v767 = vadd.f32 %v751, 0.0
        %v768 = vld [vmem:[%s3 + $0x1] sm:$0x1]
        %vm769 = vcmp.eq.s32.totalorder %v246, 1
        %vm770 = vcmp.eq.s32.totalorder %v247, 1
        %vm771 = vcmp.eq.s32.totalorder %v248, 1
        %vm772 = vcmp.eq.s32.totalorder %v249, 1
        %vm773 = vcmp.eq.s32.totalorder %v250, 1
        %vm774 = vcmp.eq.s32.totalorder %v251, 1
        %vm775 = vcmp.eq.s32.totalorder %v252, 1
        %vm776 = vcmp.eq.s32.totalorder %v253, 1
        %vm777 = vcmp.eq.s32.totalorder %v254, 1
        %vm778 = vcmp.eq.s32.totalorder %v255, 1
        %vm779 = vcmp.eq.s32.totalorder %v256, 1
        %vm780 = vcmp.eq.s32.totalorder %v257, 1
        %vm781 = vcmp.eq.s32.totalorder %v258, 1
        %vm782 = vcmp.eq.s32.totalorder %v259, 1
        %vm783 = vcmp.eq.s32.totalorder %v260, 1
        %vm784 = vcmp.eq.s32.totalorder %v261, 1
        %v785 = vsel %vm769, 1, 0
        %v786 = vsel %vm770, 1, 0
        %v787 = vsel %vm771, 1, 0
        %v788 = vsel %vm772, 1, 0
        %v789 = vsel %vm773, 1, 0
        %v790 = vsel %vm774, 1, 0
        %v791 = vsel %vm775, 1, 0
        %v792 = vsel %vm776, 1, 0
        %v793 = vsel %vm777, 1, 0
        %v794 = vsel %vm778, 1, 0
        %v795 = vsel %vm779, 1, 0
        %v796 = vsel %vm780, 1, 0
        %v797 = vsel %vm781, 1, 0
        %v798 = vsel %vm782, 1, 0
        %v799 = vsel %vm783, 1, 0
        %v800 = vsel %vm784, 1, 0
        %v801 = vcvt.s32.f32 %v785
        %v802 = vcvt.s32.f32 %v786
        %v803 = vcvt.s32.f32 %v787
        %v804 = vcvt.s32.f32 %v788
        %v805 = vcvt.s32.f32 %v789
        %v806 = vcvt.s32.f32 %v790
        %v807 = vcvt.s32.f32 %v791
        %v808 = vcvt.s32.f32 %v792
        %v809 = vcvt.s32.f32 %v793
        %v810 = vcvt.s32.f32 %v794
        %v811 = vcvt.s32.f32 %v795
        %v812 = vcvt.s32.f32 %v796
        %v813 = vcvt.s32.f32 %v797
        %v814 = vcvt.s32.f32 %v798
        %v815 = vcvt.s32.f32 %v799
        %v816 = vcvt.s32.f32 %v800
        %818 = vset.pattern.permute.xlu0 1
        %819 = vperm.xlu0 %818, %v801
        %v820 = vpop.permute.xlu0 %819
        %823 = vset.pattern.permute.xlu0 1
        %824 = vperm.xlu0 %823, %v802
        %v825 = vpop.permute.xlu0 %824
        %828 = vset.pattern.permute.xlu0 1
        %829 = vperm.xlu0 %828, %v803
        %v830 = vpop.permute.xlu0 %829
        %833 = vset.pattern.permute.xlu0 1
        %834 = vperm.xlu0 %833, %v804
        %v835 = vpop.permute.xlu0 %834
        %838 = vset.pattern.permute.xlu0 1
        %839 = vperm.xlu0 %838, %v805
        %v840 = vpop.permute.xlu0 %839
        %843 = vset.pattern.permute.xlu0 1
        %844 = vperm.xlu0 %843, %v806
        %v845 = vpop.permute.xlu0 %844
        %848 = vset.pattern.permute.xlu0 1
        %849 = vperm.xlu0 %848, %v807
        %v850 = vpop.permute.xlu0 %849
        %853 = vset.pattern.permute.xlu0 1
        %854 = vperm.xlu0 %853, %v808
        %v855 = vpop.permute.xlu0 %854
        %858 = vset.pattern.permute.xlu0 1
        %859 = vperm.xlu0 %858, %v809
        %v860 = vpop.permute.xlu0 %859
        %863 = vset.pattern.permute.xlu0 1
        %864 = vperm.xlu0 %863, %v810
        %v865 = vpop.permute.xlu0 %864
        %868 = vset.pattern.permute.xlu0 1
        %869 = vperm.xlu0 %868, %v811
        %v870 = vpop.permute.xlu0 %869
        %873 = vset.pattern.permute.xlu0 1
        %874 = vperm.xlu0 %873, %v812
        %v875 = vpop.permute.xlu0 %874
        %878 = vset.pattern.permute.xlu0 1
        %879 = vperm.xlu0 %878, %v813
        %v880 = vpop.permute.xlu0 %879
        %883 = vset.pattern.permute.xlu0 1
        %884 = vperm.xlu0 %883, %v814
        %v885 = vpop.permute.xlu0 %884
        %888 = vset.pattern.permute.xlu0 1
        %889 = vperm.xlu0 %888, %v815
        %v890 = vpop.permute.xlu0 %889
        %893 = vset.pattern.permute.xlu0 1
        %894 = vperm.xlu0 %893, %v816
        %v895 = vpop.permute.xlu0 %894
        %v897 = vlaneseq
        %v898 = vshrl.u32 %v897, 7
        %v899 = vsub.s32 0, %v898
        %v900 = vrot.slane %v768, %v899
        %v901 = vmul.f32 %v820, %v900
        %v902 = vmul.f32 %v825, %v900
        %v903 = vmul.f32 %v830, %v900
        %v904 = vmul.f32 %v835, %v900
        %v905 = vmul.f32 %v840, %v900
        %v906 = vmul.f32 %v845, %v900
        %v907 = vmul.f32 %v850, %v900
        %v908 = vmul.f32 %v855, %v900
        %v909 = vmul.f32 %v860, %v900
        %v910 = vmul.f32 %v865, %v900
        %v911 = vmul.f32 %v870, %v900
        %v912 = vmul.f32 %v875, %v900
        %v913 = vmul.f32 %v880, %v900
        %v914 = vmul.f32 %v885, %v900
        %v915 = vmul.f32 %v890, %v900
        %v916 = vmul.f32 %v895, %v900
        %v917 = vadd.f32 %v752, %v901
        %v918 = vadd.f32 %v753, %v902
        %v919 = vadd.f32 %v754, %v903
        %v920 = vadd.f32 %v755, %v904
        %v921 = vadd.f32 %v756, %v905
        %v922 = vadd.f32 %v757, %v906
        %v923 = vadd.f32 %v758, %v907
        %v924 = vadd.f32 %v759, %v908
        %v925 = vadd.f32 %v760, %v909
        %v926 = vadd.f32 %v761, %v910
        %v927 = vadd.f32 %v762, %v911
        %v928 = vadd.f32 %v763, %v912
        %v929 = vadd.f32 %v764, %v913
        %v930 = vadd.f32 %v765, %v914
        %v931 = vadd.f32 %v766, %v915
        %v932 = vadd.f32 %v767, %v916
        %v933 = vld [vmem:[%s3 + $0x2] sm:$0x1]
        %vm934 = vcmp.eq.s32.totalorder %v246, 2
        %vm935 = vcmp.eq.s32.totalorder %v247, 2
        %vm936 = vcmp.eq.s32.totalorder %v248, 2
        %vm937 = vcmp.eq.s32.totalorder %v249, 2
        %vm938 = vcmp.eq.s32.totalorder %v250, 2
        %vm939 = vcmp.eq.s32.totalorder %v251, 2
        %vm940 = vcmp.eq.s32.totalorder %v252, 2
        %vm941 = vcmp.eq.s32.totalorder %v253, 2
        %vm942 = vcmp.eq.s32.totalorder %v254, 2
        %vm943 = vcmp.eq.s32.totalorder %v255, 2
        %vm944 = vcmp.eq.s32.totalorder %v256, 2
        %vm945 = vcmp.eq.s32.totalorder %v257, 2
        %vm946 = vcmp.eq.s32.totalorder %v258, 2
        %vm947 = vcmp.eq.s32.totalorder %v259, 2
        %vm948 = vcmp.eq.s32.totalorder %v260, 2
        %vm949 = vcmp.eq.s32.totalorder %v261, 2
        %v950 = vsel %vm934, 1, 0
        %v951 = vsel %vm935, 1, 0
        %v952 = vsel %vm936, 1, 0
        %v953 = vsel %vm937, 1, 0
        %v954 = vsel %vm938, 1, 0
        %v955 = vsel %vm939, 1, 0
        %v956 = vsel %vm940, 1, 0
        %v957 = vsel %vm941, 1, 0
        %v958 = vsel %vm942, 1, 0
        %v959 = vsel %vm943, 1, 0
        %v960 = vsel %vm944, 1, 0
        %v961 = vsel %vm945, 1, 0
        %v962 = vsel %vm946, 1, 0
        %v963 = vsel %vm947, 1, 0
        %v964 = vsel %vm948, 1, 0
        %v965 = vsel %vm949, 1, 0
        %v966 = vcvt.s32.f32 %v950
        %v967 = vcvt.s32.f32 %v951
        %v968 = vcvt.s32.f32 %v952
        %v969 = vcvt.s32.f32 %v953
        %v970 = vcvt.s32.f32 %v954
        %v971 = vcvt.s32.f32 %v955
        %v972 = vcvt.s32.f32 %v956
        %v973 = vcvt.s32.f32 %v957
        %v974 = vcvt.s32.f32 %v958
        %v975 = vcvt.s32.f32 %v959
        %v976 = vcvt.s32.f32 %v960
        %v977 = vcvt.s32.f32 %v961
        %v978 = vcvt.s32.f32 %v962
        %v979 = vcvt.s32.f32 %v963
        %v980 = vcvt.s32.f32 %v964
        %v981 = vcvt.s32.f32 %v965
        %983 = vset.pattern.permute.xlu0 1
        %984 = vperm.xlu0 %983, %v966
        %v985 = vpop.permute.xlu0 %984
        %988 = vset.pattern.permute.xlu0 1
        %989 = vperm.xlu0 %988, %v967
        %v990 = vpop.permute.xlu0 %989
        %993 = vset.pattern.permute.xlu0 1
        %994 = vperm.xlu0 %993, %v968
        %v995 = vpop.permute.xlu0 %994
        %998 = vset.pattern.permute.xlu0 1
        %999 = vperm.xlu0 %998, %v969
        %v1000 = vpop.permute.xlu0 %999
        %1003 = vset.pattern.permute.xlu0 1
        %1004 = vperm.xlu0 %1003, %v970
        %v1005 = vpop.permute.xlu0 %1004
        %1008 = vset.pattern.permute.xlu0 1
        %1009 = vperm.xlu0 %1008, %v971
        %v1010 = vpop.permute.xlu0 %1009
        %1013 = vset.pattern.permute.xlu0 1
        %1014 = vperm.xlu0 %1013, %v972
        %v1015 = vpop.permute.xlu0 %1014
        %1018 = vset.pattern.permute.xlu0 1
        %1019 = vperm.xlu0 %1018, %v973
        %v1020 = vpop.permute.xlu0 %1019
        %1023 = vset.pattern.permute.xlu0 1
        %1024 = vperm.xlu0 %1023, %v974
        %v1025 = vpop.permute.xlu0 %1024
        %1028 = vset.pattern.permute.xlu0 1
        %1029 = vperm.xlu0 %1028, %v975
        %v1030 = vpop.permute.xlu0 %1029
        %1033 = vset.pattern.permute.xlu0 1
        %1034 = vperm.xlu0 %1033, %v976
        %v1035 = vpop.permute.xlu0 %1034
        %1038 = vset.pattern.permute.xlu0 1
        %1039 = vperm.xlu0 %1038, %v977
        %v1040 = vpop.permute.xlu0 %1039
        %1043 = vset.pattern.permute.xlu0 1
        %1044 = vperm.xlu0 %1043, %v978
        %v1045 = vpop.permute.xlu0 %1044
        %1048 = vset.pattern.permute.xlu0 1
        %1049 = vperm.xlu0 %1048, %v979
        %v1050 = vpop.permute.xlu0 %1049
        %1053 = vset.pattern.permute.xlu0 1
        %1054 = vperm.xlu0 %1053, %v980
        %v1055 = vpop.permute.xlu0 %1054
        %1058 = vset.pattern.permute.xlu0 1
        %1059 = vperm.xlu0 %1058, %v981
        %v1060 = vpop.permute.xlu0 %1059
        %v1062 = vlaneseq
        %v1063 = vshrl.u32 %v1062, 7
        %v1064 = vsub.s32 0, %v1063
        %v1065 = vrot.slane %v933, %v1064
        %v1066 = vmul.f32 %v985, %v1065
        %v1067 = vmul.f32 %v990, %v1065
        %v1068 = vmul.f32 %v995, %v1065
        %v1069 = vmul.f32 %v1000, %v1065
        %v1070 = vmul.f32 %v1005, %v1065
        %v1071 = vmul.f32 %v1010, %v1065
        %v1072 = vmul.f32 %v1015, %v1065
        %v1073 = vmul.f32 %v1020, %v1065
        %v1074 = vmul.f32 %v1025, %v1065
        %v1075 = vmul.f32 %v1030, %v1065
        %v1076 = vmul.f32 %v1035, %v1065
        %v1077 = vmul.f32 %v1040, %v1065
        %v1078 = vmul.f32 %v1045, %v1065
        %v1079 = vmul.f32 %v1050, %v1065
        %v1080 = vmul.f32 %v1055, %v1065
        %v1081 = vmul.f32 %v1060, %v1065
        %v1082 = vadd.f32 %v917, %v1066
        %v1083 = vadd.f32 %v918, %v1067
        %v1084 = vadd.f32 %v919, %v1068
        %v1085 = vadd.f32 %v920, %v1069
        %v1086 = vadd.f32 %v921, %v1070
        %v1087 = vadd.f32 %v922, %v1071
        %v1088 = vadd.f32 %v923, %v1072
        %v1089 = vadd.f32 %v924, %v1073
        %v1090 = vadd.f32 %v925, %v1074
        %v1091 = vadd.f32 %v926, %v1075
        %v1092 = vadd.f32 %v927, %v1076
        %v1093 = vadd.f32 %v928, %v1077
        %v1094 = vadd.f32 %v929, %v1078
        %v1095 = vadd.f32 %v930, %v1079
        %v1096 = vadd.f32 %v931, %v1080
        %v1097 = vadd.f32 %v932, %v1081
        %v1098 = vld [vmem:[#allocation2] sm:$0xff]
        %v1099 = vld [vmem:[#allocation2 + $0x8] sm:$0xff]
        %v1100 = vld [vmem:[#allocation2 + $0x10] sm:$0xff]
        %v1101 = vld [vmem:[#allocation2 + $0x18] sm:$0xff]
        %v1102 = vld [vmem:[#allocation2 + $0x20] sm:$0xff]
        %v1103 = vld [vmem:[#allocation2 + $0x28] sm:$0xff]
        %v1104 = vld [vmem:[#allocation2 + $0x30] sm:$0xff]
        %v1105 = vld [vmem:[#allocation2 + $0x38] sm:$0xff]
        %v1106 = vld [vmem:[#allocation2 + $0x40] sm:$0xff]
        %v1107 = vld [vmem:[#allocation2 + $0x48] sm:$0xff]
        %v1108 = vld [vmem:[#allocation2 + $0x50] sm:$0xff]
        %v1109 = vld [vmem:[#allocation2 + $0x58] sm:$0xff]
        %v1110 = vld [vmem:[#allocation2 + $0x60] sm:$0xff]
        %v1111 = vld [vmem:[#allocation2 + $0x68] sm:$0xff]
        %v1112 = vld [vmem:[#allocation2 + $0x70] sm:$0xff]
        %v1113 = vld [vmem:[#allocation2 + $0x78] sm:$0xff]
        %v1178 = vunpack.c.l.b16 %v539
        %v1179 = vunpack.c.l.b16 %v540
        %v1180 = vunpack.c.l.b16 %v541
        %v1181 = vunpack.c.l.b16 %v542
        %v1182 = vunpack.c.l.b16 %v543
        %v1183 = vunpack.c.l.b16 %v544
        %v1184 = vunpack.c.l.b16 %v545
        %v1185 = vunpack.c.l.b16 %v546
        %v1186 = vunpack.c.l.b16 %v547
        %v1187 = vunpack.c.l.b16 %v548
        %v1188 = vunpack.c.l.b16 %v549
        %v1189 = vunpack.c.l.b16 %v550
        %v1190 = vunpack.c.l.b16 %v551
        %v1191 = vunpack.c.l.b16 %v552
        %v1192 = vunpack.c.l.b16 %v553
        %v1193 = vunpack.c.l.b16 %v554
        %v1194 = vunpack.c.l.b16 %v555
        %v1195 = vunpack.c.l.b16 %v556
        %v1196 = vunpack.c.l.b16 %v557
        %v1197 = vunpack.c.l.b16 %v558
        %v1198 = vunpack.c.l.b16 %v559
        %v1199 = vunpack.c.l.b16 %v560
        %v1200 = vunpack.c.l.b16 %v561
        %v1201 = vunpack.c.l.b16 %v562
        %v1202 = vunpack.c.l.b16 %v563
        %v1203 = vunpack.c.l.b16 %v564
        %v1204 = vunpack.c.l.b16 %v565
        %v1205 = vunpack.c.l.b16 %v566
        %v1206 = vunpack.c.l.b16 %v567
        %v1207 = vunpack.c.l.b16 %v568
        %v1208 = vunpack.c.l.b16 %v569
        %v1209 = vunpack.c.l.b16 %v570
        %v1210 = vunpack.c.l.b16 %v571
        %v1211 = vunpack.c.l.b16 %v572
        %v1212 = vunpack.c.l.b16 %v573
        %v1213 = vunpack.c.l.b16 %v574
        %v1214 = vunpack.c.l.b16 %v575
        %v1215 = vunpack.c.l.b16 %v576
        %v1216 = vunpack.c.l.b16 %v577
        %v1217 = vunpack.c.l.b16 %v578
        %v1218 = vunpack.c.l.b16 %v579
        %v1219 = vunpack.c.l.b16 %v580
        %v1220 = vunpack.c.l.b16 %v581
        %v1221 = vunpack.c.l.b16 %v582
        %v1222 = vunpack.c.l.b16 %v583
        %v1223 = vunpack.c.l.b16 %v584
        %v1224 = vunpack.c.l.b16 %v585
        %v1225 = vunpack.c.l.b16 %v586
        %v1226 = vunpack.c.l.b16 %v587
        %v1227 = vunpack.c.l.b16 %v588
        %v1228 = vunpack.c.l.b16 %v589
        %v1229 = vunpack.c.l.b16 %v590
        %v1230 = vunpack.c.l.b16 %v591
        %v1231 = vunpack.c.l.b16 %v592
        %v1232 = vunpack.c.l.b16 %v593
        %v1233 = vunpack.c.l.b16 %v594
        %v1234 = vunpack.c.l.b16 %v595
        %v1235 = vunpack.c.l.b16 %v596
        %v1236 = vunpack.c.l.b16 %v597
        %v1237 = vunpack.c.l.b16 %v598
        %v1238 = vunpack.c.l.b16 %v599
        %v1239 = vunpack.c.l.b16 %v600
        %v1240 = vunpack.c.l.b16 %v601
        %v1241 = vunpack.c.l.b16 %v602
        %v1242 = vpack.c.b16 %v1179, %v1178
        %v1243 = vpack.c.b16 %v1181, %v1180
        %v1244 = vpack.c.b16 %v1183, %v1182
        %v1245 = vpack.c.b16 %v1185, %v1184
        %v1246 = vpack.c.b16 %v1187, %v1186
        %v1247 = vpack.c.b16 %v1189, %v1188
        %v1248 = vpack.c.b16 %v1191, %v1190
        %v1249 = vpack.c.b16 %v1193, %v1192
        %v1250 = vpack.c.b16 %v1195, %v1194
        %v1251 = vpack.c.b16 %v1197, %v1196
        %v1252 = vpack.c.b16 %v1199, %v1198
        %v1253 = vpack.c.b16 %v1201, %v1200
        %v1254 = vpack.c.b16 %v1203, %v1202
        %v1255 = vpack.c.b16 %v1205, %v1204
        %v1256 = vpack.c.b16 %v1207, %v1206
        %v1257 = vpack.c.b16 %v1209, %v1208
        %v1258 = vpack.c.b16 %v1211, %v1210
        %v1259 = vpack.c.b16 %v1213, %v1212
        %v1260 = vpack.c.b16 %v1215, %v1214
        %v1261 = vpack.c.b16 %v1217, %v1216
        %v1262 = vpack.c.b16 %v1219, %v1218
        %v1263 = vpack.c.b16 %v1221, %v1220
        %v1264 = vpack.c.b16 %v1223, %v1222
        %v1265 = vpack.c.b16 %v1225, %v1224
        %v1266 = vpack.c.b16 %v1227, %v1226
        %v1267 = vpack.c.b16 %v1229, %v1228
        %v1268 = vpack.c.b16 %v1231, %v1230
        %v1269 = vpack.c.b16 %v1233, %v1232
        %v1270 = vpack.c.b16 %v1235, %v1234
        %v1271 = vpack.c.b16 %v1237, %v1236
        %v1272 = vpack.c.b16 %v1239, %v1238
        %v1273 = vpack.c.b16 %v1241, %v1240
        %1306 = vmatprep.subr.bf16.mxu0 0
        %1307 = vmatpush1.bf16.msra.mxu0 %v1242
        %1308 = vmatprep.subr.bf16.mxu0 0
        %1309 = vmatpush1.bf16.msra.mxu0 %v1243
        %1310 = vmatprep.subr.bf16.mxu0 0
        %1311 = vmatpush1.bf16.msra.mxu0 %v1244
        %1312 = vmatprep.subr.bf16.mxu0 0
        %1313 = vmatpush1.bf16.msra.mxu0 %v1245
        %1314 = vmatprep.subr.bf16.mxu0 0
        %1315 = vmatpush1.bf16.msra.mxu0 %v1246
        %1316 = vmatprep.subr.bf16.mxu0 0
        %1317 = vmatpush1.bf16.msra.mxu0 %v1247
        %1318 = vmatprep.subr.bf16.mxu0 0
        %1319 = vmatpush1.bf16.msra.mxu0 %v1248
        %1320 = vmatprep.subr.bf16.mxu0 0
        %1321 = vmatpush1.bf16.msra.mxu0 %v1249
        %1322 = vmatprep.subr.bf16.mxu0 0
        %1323 = vmatpush1.bf16.msra.mxu0 %v1250
        %1324 = vmatprep.subr.bf16.mxu0 0
        %1325 = vmatpush1.bf16.msra.mxu0 %v1251
        %1326 = vmatprep.subr.bf16.mxu0 0
        %1327 = vmatpush1.bf16.msra.mxu0 %v1252
        %1328 = vmatprep.subr.bf16.mxu0 0
        %1329 = vmatpush1.bf16.msra.mxu0 %v1253
        %1330 = vmatprep.subr.bf16.mxu0 0
        %1331 = vmatpush1.bf16.msra.mxu0 %v1254
        %1332 = vmatprep.subr.bf16.mxu0 0
        %1333 = vmatpush1.bf16.msra.mxu0 %v1255
        %1334 = vmatprep.subr.bf16.mxu0 0
        %1335 = vmatpush1.bf16.msra.mxu0 %v1256
        %1336 = vmatprep.subr.bf16.mxu0 0
        %1337 = vmatpush1.bf16.msra.mxu0 %v1257
        %1338 = vmatprep.mubr.bf16.mxu0 %v508
        %1339 = vmatmul.mubr.bf16.gmra.mrb[0].mxu0 %v507
        %v1340 = vpop.f32.mrb[0].mxu0
        %v1341 = vadd.f32 %v1098, %v1340
        %v1342 = vpop.f32.mrb[0].mxu0
        %v1343 = vpop.f32.mrb[0].mxu0
        %v1344 = vadd.f32 %v1099, %v1343
        %v1345 = vpop.f32.mrb[0].mxu0
        %1346 = vmatprep.mubr.bf16.mxu0 %v512
        %1347 = vmatmul.mubr.bf16.gmra.mrb[0].mxu0 %v511
        %v1348 = vpop.f32.mrb[0].mxu0
        %v1349 = vadd.f32 %v1100, %v1348
        %v1350 = vpop.f32.mrb[0].mxu0
        %v1351 = vpop.f32.mrb[0].mxu0
        %v1352 = vadd.f32 %v1101, %v1351
        %v1353 = vpop.f32.mrb[0].mxu0
        %1354 = vmatprep.mubr.bf16.mxu0 %v516
        %1355 = vmatmul.mubr.bf16.gmra.mrb[0].mxu0 %v515
        %v1356 = vpop.f32.mrb[0].mxu0
        %v1357 = vadd.f32 %v1102, %v1356
        %v1358 = vpop.f32.mrb[0].mxu0
        %v1359 = vpop.f32.mrb[0].mxu0
        %v1360 = vadd.f32 %v1103, %v1359
        %v1361 = vpop.f32.mrb[0].mxu0
        %1362 = vmatprep.mubr.bf16.mxu0 %v520
        %1363 = vmatmul.mubr.bf16.gmra.mrb[0].mxu0 %v519
        %v1364 = vpop.f32.mrb[0].mxu0
        %v1365 = vadd.f32 %v1104, %v1364
        %v1366 = vpop.f32.mrb[0].mxu0
        %v1367 = vpop.f32.mrb[0].mxu0
        %v1368 = vadd.f32 %v1105, %v1367
        %v1369 = vpop.f32.mrb[0].mxu0
        %1370 = vmatprep.mubr.bf16.mxu0 %v524
        %1371 = vmatmul.mubr.bf16.gmra.mrb[0].mxu0 %v523
        %v1372 = vpop.f32.mrb[0].mxu0
        %v1373 = vadd.f32 %v1106, %v1372
        %v1374 = vpop.f32.mrb[0].mxu0
        %v1375 = vpop.f32.mrb[0].mxu0
        %v1376 = vadd.f32 %v1107, %v1375
        %v1377 = vpop.f32.mrb[0].mxu0
        %1378 = vmatprep.mubr.bf16.mxu0 %v528
        %1379 = vmatmul.mubr.bf16.gmra.mrb[0].mxu0 %v527
        %v1380 = vpop.f32.mrb[0].mxu0
        %v1381 = vadd.f32 %v1108, %v1380
        %v1382 = vpop.f32.mrb[0].mxu0
        %v1383 = vpop.f32.mrb[0].mxu0
        %v1384 = vadd.f32 %v1109, %v1383
        %v1385 = vpop.f32.mrb[0].mxu0
        %1386 = vmatprep.mubr.bf16.mxu0 %v532
        %1387 = vmatmul.mubr.bf16.gmra.mrb[0].mxu0 %v531
        %v1388 = vpop.f32.mrb[0].mxu0
        %v1389 = vadd.f32 %v1110, %v1388
        %v1390 = vpop.f32.mrb[0].mxu0
        %v1391 = vpop.f32.mrb[0].mxu0
        %v1392 = vadd.f32 %v1111, %v1391
        %v1393 = vpop.f32.mrb[0].mxu0
        %1394 = vmatprep.mubr.bf16.mxu0 %v536
        %1395 = vmatmul.mubr.bf16.gmra.mrb[0].mxu0 %v535
        %v1396 = vpop.f32.mrb[0].mxu0
        %v1397 = vadd.f32 %v1112, %v1396
        %v1398 = vpop.f32.mrb[0].mxu0
        %v1399 = vpop.f32.mrb[0].mxu0
        %v1400 = vadd.f32 %v1113, %v1399
        %v1401 = vpop.f32.mrb[0].mxu0
        %1402 = vdwg.mxu0
        %1403 = vmatprep.subr.bf16.mxu0 0
        %1404 = vmatpush1.bf16.msra.mxu0 %v1258
        %1405 = vmatprep.subr.bf16.mxu0 0
        %1406 = vmatpush1.bf16.msra.mxu0 %v1259
        %1407 = vmatprep.subr.bf16.mxu0 0
        %1408 = vmatpush1.bf16.msra.mxu0 %v1260
        %1409 = vmatprep.subr.bf16.mxu0 0
        %1410 = vmatpush1.bf16.msra.mxu0 %v1261
        %1411 = vmatprep.subr.bf16.mxu0 0
        %1412 = vmatpush1.bf16.msra.mxu0 %v1262
        %1413 = vmatprep.subr.bf16.mxu0 0
        %1414 = vmatpush1.bf16.msra.mxu0 %v1263
        %1415 = vmatprep.subr.bf16.mxu0 0
        %1416 = vmatpush1.bf16.msra.mxu0 %v1264
        %1417 = vmatprep.subr.bf16.mxu0 0
        %1418 = vmatpush1.bf16.msra.mxu0 %v1265
        %1419 = vmatprep.subr.bf16.mxu0 0
        %1420 = vmatpush1.bf16.msra.mxu0 %v1266
        %1421 = vmatprep.subr.bf16.mxu0 0
        %1422 = vmatpush1.bf16.msra.mxu0 %v1267
        %1423 = vmatprep.subr.bf16.mxu0 0
        %1424 = vmatpush1.bf16.msra.mxu0 %v1268
        %1425 = vmatprep.subr.bf16.mxu0 0
        %1426 = vmatpush1.bf16.msra.mxu0 %v1269
        %1427 = vmatprep.subr.bf16.mxu0 0
        %1428 = vmatpush1.bf16.msra.mxu0 %v1270
        %1429 = vmatprep.subr.bf16.mxu0 0
        %1430 = vmatpush1.bf16.msra.mxu0 %v1271
        %1431 = vmatprep.subr.bf16.mxu0 0
        %1432 = vmatpush1.bf16.msra.mxu0 %v1272
        %1433 = vmatprep.subr.bf16.mxu0 0
        %1434 = vmatpush1.bf16.msra.mxu0 %v1273
        %1435 = vmatprep.mubr.bf16.mxu0 %v510
        %1436 = vmatmul.mubr.bf16.gmra.mrb[0].mxu0 %v509
        %v1437 = vpop.f32.mrb[0].mxu0
        %v1438 = vadd.f32 %v1341, %v1437
        %v1439 = vpop.f32.mrb[0].mxu0
        %v1440 = vpop.f32.mrb[0].mxu0
        %v1441 = vadd.f32 %v1344, %v1440
        %v1442 = vpop.f32.mrb[0].mxu0
        %1443 = vmatprep.mubr.bf16.mxu0 %v514
        %1444 = vmatmul.mubr.bf16.gmra.mrb[0].mxu0 %v513
        %v1445 = vpop.f32.mrb[0].mxu0
        %v1446 = vadd.f32 %v1349, %v1445
        %v1447 = vpop.f32.mrb[0].mxu0
        %v1448 = vpop.f32.mrb[0].mxu0
        %v1449 = vadd.f32 %v1352, %v1448
        %v1450 = vpop.f32.mrb[0].mxu0
        %1451 = vmatprep.mubr.bf16.mxu0 %v518
        %1452 = vmatmul.mubr.bf16.gmra.mrb[0].mxu0 %v517
        %v1453 = vpop.f32.mrb[0].mxu0
        %v1454 = vadd.f32 %v1357, %v1453
        %v1455 = vpop.f32.mrb[0].mxu0
        %v1456 = vpop.f32.mrb[0].mxu0
        %v1457 = vadd.f32 %v1360, %v1456
        %v1458 = vpop.f32.mrb[0].mxu0
        %1459 = vmatprep.mubr.bf16.mxu0 %v522
        %1460 = vmatmul.mubr.bf16.gmra.mrb[0].mxu0 %v521
        %v1461 = vpop.f32.mrb[0].mxu0
        %v1462 = vadd.f32 %v1365, %v1461
        %v1463 = vpop.f32.mrb[0].mxu0
        %v1464 = vpop.f32.mrb[0].mxu0
        %v1465 = vadd.f32 %v1368, %v1464
        %v1466 = vpop.f32.mrb[0].mxu0
        %1467 = vmatprep.mubr.bf16.mxu0 %v526
        %1468 = vmatmul.mubr.bf16.gmra.mrb[0].mxu0 %v525
        %v1469 = vpop.f32.mrb[0].mxu0
        %v1470 = vadd.f32 %v1373, %v1469
        %v1471 = vpop.f32.mrb[0].mxu0
        %v1472 = vpop.f32.mrb[0].mxu0
        %v1473 = vadd.f32 %v1376, %v1472
        %v1474 = vpop.f32.mrb[0].mxu0
        %1475 = vmatprep.mubr.bf16.mxu0 %v530
        %1476 = vmatmul.mubr.bf16.gmra.mrb[0].mxu0 %v529
        %v1477 = vpop.f32.mrb[0].mxu0
        %v1478 = vadd.f32 %v1381, %v1477
        %v1479 = vpop.f32.mrb[0].mxu0
        %v1480 = vpop.f32.mrb[0].mxu0
        %v1481 = vadd.f32 %v1384, %v1480
        %v1482 = vpop.f32.mrb[0].mxu0
        %1483 = vmatprep.mubr.bf16.mxu0 %v534
        %1484 = vmatmul.mubr.bf16.gmra.mrb[0].mxu0 %v533
        %v1485 = vpop.f32.mrb[0].mxu0
        %v1486 = vadd.f32 %v1389, %v1485
        %v1487 = vpop.f32.mrb[0].mxu0
        %v1488 = vpop.f32.mrb[0].mxu0
        %v1489 = vadd.f32 %v1392, %v1488
        %v1490 = vpop.f32.mrb[0].mxu0
        %1491 = vmatprep.mubr.bf16.mxu0 %v538
        %1492 = vmatmul.mubr.bf16.gmra.mrb[0].mxu0 %v537
        %v1493 = vpop.f32.mrb[0].mxu0
        %v1494 = vadd.f32 %v1397, %v1493
        %v1495 = vpop.f32.mrb[0].mxu0
        %v1496 = vpop.f32.mrb[0].mxu0
        %v1497 = vadd.f32 %v1400, %v1496
        %v1498 = vpop.f32.mrb[0].mxu0
        %1499 = vdwg.mxu0
        %v1500 = vadd.f32 %v1438, %v1082
        %v1501 = vadd.f32 %v1441, %v1083
        %v1502 = vadd.f32 %v1446, %v1084
        %v1503 = vadd.f32 %v1449, %v1085
        %v1504 = vadd.f32 %v1454, %v1086
        %v1505 = vadd.f32 %v1457, %v1087
        %v1506 = vadd.f32 %v1462, %v1088
        %v1507 = vadd.f32 %v1465, %v1089
        %v1508 = vadd.f32 %v1470, %v1090
        %v1509 = vadd.f32 %v1473, %v1091
        %v1510 = vadd.f32 %v1478, %v1092
        %v1511 = vadd.f32 %v1481, %v1093
        %v1512 = vadd.f32 %v1486, %v1094
        %v1513 = vadd.f32 %v1489, %v1095
        %v1514 = vadd.f32 %v1494, %v1096
        %v1515 = vadd.f32 %v1497, %v1097
        %1516 = vst [vmem:[%s233] sm:$0xff] %v1500
        %1517 = vst [vmem:[%s233 + $0x8] sm:$0xff] %v1501
        %1518 = vst [vmem:[%s233 + $0x10] sm:$0xff] %v1502
        %1519 = vst [vmem:[%s233 + $0x18] sm:$0xff] %v1503
        %1520 = vst [vmem:[%s233 + $0x20] sm:$0xff] %v1504
        %1521 = vst [vmem:[%s233 + $0x28] sm:$0xff] %v1505
        %1522 = vst [vmem:[%s233 + $0x30] sm:$0xff] %v1506
        %1523 = vst [vmem:[%s233 + $0x38] sm:$0xff] %v1507
        %1524 = vst [vmem:[%s233 + $0x40] sm:$0xff] %v1508
        %1525 = vst [vmem:[%s233 + $0x48] sm:$0xff] %v1509
        %1526 = vst [vmem:[%s233 + $0x50] sm:$0xff] %v1510
        %1527 = vst [vmem:[%s233 + $0x58] sm:$0xff] %v1511
        %1528 = vst [vmem:[%s233 + $0x60] sm:$0xff] %v1512
        %1529 = vst [vmem:[%s233 + $0x68] sm:$0xff] %v1513
        %1530 = vst [vmem:[%s233 + $0x70] sm:$0xff] %v1514
        %1531 = vst [vmem:[%s233 + $0x78] sm:$0xff] %v1515
        %s1532 = sand.u32 %s137, 1
        %s1533 = scalar_lea.sflag [#allocation4], %s1532
        %s1534 = sand.u32 %s137, 1
        %s1535 = smul.addr %s1534, 128
        %s1536 = scalar_lea.vmem [#allocation5], %s1535
        // Predicated region
        $region41: #{tpu_custom_call.1} parent=35 // pred_check
          %p1537 = pneg %p147
        $region42: #{tpu_custom_call.1} parent=35 // pred_check_branch
          %1539 = sbr.rel (%p1537) target = $region44
        $region43: #{tpu_custom_call.1} parent=35 // pred_region
          %s1540 = sadd.s32 %s24, %s23
          %s1541 = smul.u32 16, %s1540
          %s1543 = ssub.s32 2048, 2048
          %1544 = vsyncadd %s1533, %s1543
          %s1545 = smul.addr %s1541, 128
          %s1546 = scalar_lea.hbm %s4, %s1545
          %s1547 = sshll.u32 %s1536, 4
          %s1548 = int_to_ptr.vmem [resolvable:$true] %s1547
          %1553 = dma.vmem_to_hbm [thread:$0]  %s1548, 2048, %s1546, %s1533, 128, 128, 8
        $region44: #{tpu_custom_call.1} parent=35 // pred_fallthru
          _
      $region36: #{tpu_custom_call.1} parent=5 // pred_fallthru
        _
      %p1554 = scmp.le.s32.totalorder 2, %s14
      // Predicated region
      $region45: #{tpu_custom_call.1} parent=5 // pred_check
        %p1555 = pneg %p1554
      $region46: #{tpu_custom_call.1} parent=5 // pred_check_branch
        %1557 = sbr.rel (%p1555) target = $region48
      $region47: #{tpu_custom_call.1} parent=5 // pred_region
        %s1558 = ssub.s32 %s14, 2
        // Predicated region
        $region49: #{tpu_custom_call.1} parent=47 // pred_check
          %p1559 = pneg %p153
        $region50: #{tpu_custom_call.1} parent=47 // pred_check_branch
          %1561 = sbr.rel (%p1559) target = $region52
        $region51: #{tpu_custom_call.1} parent=47 // pred_region
          %s1562 = sand.u32 %s138, 1
          %s1563 = scalar_lea.sflag [#allocation4], %s1562
          %s1564 = sand.u32 %s138, 1
          %s1565 = smul.addr %s1564, 128
          %s1566 = scalar_lea.vmem [#allocation5], %s1565
          %1567 = dma.done %s1563, 2048
        $region52: #{tpu_custom_call.1} parent=47 // pred_fallthru
          _
      $region48: #{tpu_custom_call.1} parent=5 // pred_fallthru
        _
    $region6: #{tpu_custom_call.1} parent=1 // loop_footer
      %s18 = sadd.s32 1, %s14
    $region7: #{tpu_custom_call.1} parent=1 // loop_footer_branch
      %13 = sbr.rel target = $region3
    $region8: #{tpu_custom_call.1} parent=1 // loop_exit
      _
    %1568 = vsyncpa [#allocation3], 1
    %s1569 = scalar_lea.sflag [#allocation3], 1
    %1570 = vsyncpa %s1569, 1
    %1571 = vsyncpa [#allocation4], 1
    %s1572 = scalar_lea.sflag [#allocation4], 1
    %1573 = vsyncpa %s1572, 1

</llo_original>
